<compile_context>
chip_gen: v5e
topology: v5e:2x2
jax: 0.10.0
libtpu: 0.0.40
codegen_flags: <defaults>
</compile_context>

<pallas_src>
import functools

import jax
import jax.numpy as jnp
from jax.experimental import pallas as pl
from jax.experimental.pallas import tpu as pltpu

_LANE = 128


def _round_up(x, m):
    return (x + m - 1) // m * m


def _tpu_vmem_bytes():
    """Per-TensorCore VMEM capacity; conservative (v7x) fallback."""
    try:
        return int(pltpu.get_tpu_info().vmem_capacity_bytes)
    except Exception:
        return 64 * 1024 * 1024


def _plan_tiles(D, V, tile_v=None):
    """Pick (sub, tile, n_par, nv_per_core, V_pad, vmem).

    sub   : inner lane sub-block; bounds the live vreg set (~8 f32 vregs per
            live (D, sub) array) independent of the DMA tile size.
    tile  : grid-level V tile (DMA / pipeline granularity); generation-aware
            VMEM budget, targeting >= 1024 lanes to amortize grid-step cost.
    n_par : leading "parallel" grid axis (2 -> both v7x TensorCores).
    """
    vmem = _tpu_vmem_bytes()
    # Inner compute sub-block: keep D*sub*4 bytes <= ~32 KiB per live array.
    sub = max(_LANE, (8192 // max(D, 1)) // _LANE * _LANE)

    if tile_v is None:
        # Double-buffered words+tree blocks should fit in ~35% of VMEM.
        budget = int(vmem * 0.35)
        vmem_tile = max(sub, budget // (2 * 2 * D * 4) // sub * sub)
        tile = min(8 * sub, vmem_tile, _round_up(V, sub))
    else:
        assert tile_v % _LANE == 0, "tile_v must be a multiple of 128"
        tile = tile_v
        sub = min(sub, tile)
        if tile % sub != 0:
            sub = _LANE

    nv_total = pl.cdiv(V, tile)
    n_par = 2 if nv_total >= 2 else 1
    nv_per_core = pl.cdiv(nv_total, n_par)
    v_pad = n_par * nv_per_core * tile
    return sub, tile, n_par, nv_per_core, v_pad, vmem


# ----------------------------------------------------------------------------
# General path: per-row (D, C) / (D, T) gather indices (exact torch.gather).
# Streams the (D, V) tables tile-by-tile and builds mask-based gathers.
# ----------------------------------------------------------------------------
def _kmer2vec_scan_kernel(ctx_idx_ref, tgt_idx_ref, words_ref, tree_ref,
                          ctx_out_ref, tgt_out_ref, *, sub):
    p = pl.program_id(0)                 # parallel V split (megacore on v7x)
    v = pl.program_id(1)                 # V tile within this core's share
    nv_per_core = pl.num_programs(1)

    D, TV = words_ref.shape
    _, C = ctx_idx_ref.shape
    _, T = tgt_idx_ref.shape
    n_sub = TV // sub                    # static

    @pl.when(v == 0)
    def _init():
        ctx_out_ref[...] = jnp.zeros_like(ctx_out_ref)
        tgt_out_ref[...] = jnp.zeros_like(tgt_out_ref)

    tile_base = (p * nv_per_core + v) * TV       # global column id of lane 0

    ctx_idx = ctx_idx_ref[...]                   # (D, C) i32, resident
    tgt_idx = tgt_idx_ref[...]                   # (D, T) i32, resident

    # Constant iotas, hoisted out of the sub-block loop.
    lane = jax.lax.broadcasted_iota(jnp.int32, (D, sub), 1)
    t_pos = jax.lax.broadcasted_iota(jnp.int32, (1, T), 1)

    def body(j, carry):
        ctx_part, tgt_part = carry               # (D, 1) f32, (D, T) f32
        start = pl.multiple_of(j * sub, sub)
        w = words_ref[:, pl.ds(start, sub)]      # (D, sub)
        tr = tree_ref[:, pl.ds(start, sub)]      # (D, sub)
        base = tile_base + start

        # Context gather: multiplicity-count mask (handles duplicate indices
        # exactly like torch.gather + mean); seeded from the first compare,
        # then ONE multiply + ONE lane reduce.
        ctx_rel = ctx_idx - base                 # cheap (D, C) scalar shift
        cnt = (lane == ctx_rel[:, 0:1]).astype(jnp.float32)
        for c in range(1, C):                    # small static C, unrolled
            cnt = cnt + (lane == ctx_rel[:, c:c + 1]).astype(jnp.float32)
        ctx_part = ctx_part + jnp.sum(w * cnt, axis=1, keepdims=True)

        # Target gather: per-column select + lane reduce, placed into an
        # in-register (D, T) partial (single out-ref RMW per grid step).
        tgt_rel = tgt_idx - base
        for t in range(T):                       # small static T, unrolled
            col = jnp.sum(jnp.where(lane == tgt_rel[:, t:t + 1], tr, 0.0),
                          axis=1, keepdims=True)             # (D, 1)
            tgt_part = tgt_part + jnp.where(t_pos == t, col, 0.0)
        return ctx_part, tgt_part

    init = (jnp.zeros((D, 1), jnp.float32), jnp.zeros((D, T), jnp.float32))
    ctx_part, tgt_part = jax.lax.fori_loop(0, n_sub, body, init, unroll=True)

    # One read-modify-write per output per grid step.
    ctx_out_ref[...] += ctx_part[None]           # (1, D, 1)
    tgt_out_ref[...] += tgt_part[None]           # (1, D, T)


@functools.partial(jax.jit, static_argnames=("tile_v",))
def kmer2vec_forward(words, tree, ctx_idx, tgt_idx, *, tile_v=None):
    """General path: per-row gather indices (exact torch.gather semantics)."""
    D, V = words.shape
    _, C = ctx_idx.shape
    _, T = tgt_idx.shape

    sub, tile, n_par, nv_per_core, v_pad, vmem = _plan_tiles(D, V, tile_v)

    if v_pad != V:
        pad = ((0, 0), (0, v_pad - V))
        # Zero columns are safe: valid indices (< V) never match padded lanes.
        words = jnp.pad(words, pad)
        tree = jnp.pad(tree, pad)

    ctx_idx = ctx_idx.astype(jnp.int32)
    tgt_idx = tgt_idx.astype(jnp.int32)

    kernel = functools.partial(_kmer2vec_scan_kernel, sub=sub)

    grid_spec = pltpu.PrefetchScalarGridSpec(
        num_scalar_prefetch=0,
        grid=(n_par, nv_per_core),
        in_specs=[
            pl.BlockSpec((D, C), lambda p, v: (0, 0)),            # ctx_idx
            pl.BlockSpec((D, T), lambda p, v: (0, 0)),            # tgt_idx
            pl.BlockSpec((D, tile),
                         lambda p, v: (0, p * nv_per_core + v)),  # words tile
            pl.BlockSpec((D, tile),
                         lambda p, v: (0, p * nv_per_core + v)),  # tree tile
        ],
        out_specs=[
            pl.BlockSpec((1, D, 1), lambda p, v: (p, 0, 0)),      # ctx partial
            pl.BlockSpec((1, D, T), lambda p, v: (p, 0, 0)),      # tgt partial
        ],
    )

    ctx_part, tgt_part = pl.pallas_call(
        kernel,
        out_shape=(jax.ShapeDtypeStruct((n_par, D, 1), jnp.float32),
                   jax.ShapeDtypeStruct((n_par, D, T), jnp.float32)),
        grid_spec=grid_spec,
        compiler_params=pltpu.CompilerParams(
            dimension_semantics=("parallel", "arbitrary"),
            vmem_limit_bytes=int(vmem * 0.75),
        ),
    )(ctx_idx, tgt_idx, words, tree)

    # Tiny O(D*T) finalize outside the kernel keeps both TensorCores on the
    # V scan (perf-review item on v7x megacore).
    context_mean = ctx_part.sum(axis=0)[:, 0] / C          # (D,)
    target_cols = tgt_part.sum(axis=0)                     # (D, T)
    return jax.nn.sigmoid(context_mean @ target_cols)      # (T,)


# ----------------------------------------------------------------------------
# Fast path: column-uniform (C,) / (T,) indices (the usual CBOW case).
# Scalar-prefetch gather -> only the needed 128-lane blocks are DMA'd.
# ----------------------------------------------------------------------------
def _gather_columns_kernel(idx_ref, tbl_ref, out_ref):
    """Gather column idx_ref[k] of the (D, V) table into out[:, k]."""
    k = pl.program_id(0)

    @pl.when(k == 0)
    def _init():
        out_ref[...] = jnp.zeros_like(out_ref)

    D, B = tbl_ref.shape                       # (D, 128) lane-aligned block
    K = out_ref.shape[1]
    lane_in_blk = idx_ref[k] % B               # lane of the wanted column
    lane = jax.lax.broadcasted_iota(jnp.int32, (D, B), 1)
    col = jnp.sum(jnp.where(lane == lane_in_blk, tbl_ref[...], 0.0),
                  axis=1, keepdims=True)       # (D, 1)
    k_pos = jax.lax.broadcasted_iota(jnp.int32, (1, K), 1)
    out_ref[...] += jnp.where(k_pos == k, col, 0.0)   # place column k


def _gather_columns(table, idx):
    D, V = table.shape
    K = int(idx.shape[0])
    v_pad = _round_up(V, _LANE)
    if v_pad != V:
        table = jnp.pad(table, ((0, 0), (0, v_pad - V)))

    grid_spec = pltpu.PrefetchScalarGridSpec(
        num_scalar_prefetch=1,                 # the (K,) index vector -> SMEM
        grid=(K,),
        in_specs=[
            # Data-dependent index_map: DMA only the block holding column k.
            pl.BlockSpec((D, _LANE),
                         lambda k, idx_ref: (0, idx_ref[k] // _LANE)),
        ],
        out_specs=pl.BlockSpec((D, K), lambda k, idx_ref: (0, 0)),
    )
    return pl.pallas_call(
        _gather_columns_kernel,
        out_shape=jax.ShapeDtypeStruct((D, K), jnp.float32),
        grid_spec=grid_spec,
        compiler_params=pltpu.CompilerParams(
            dimension_semantics=("arbitrary",)),
    )(idx.astype(jnp.int32), table)


@jax.jit
def kmer2vec_forward_uniform(words, tree, ctx_idx, tgt_idx):
    """CBOW fast path: column-uniform (C,)/(T,) indices.

    HBM traffic is O(D*128*(C+T)) instead of O(2*D*V).
    """
    C = ctx_idx.shape[0]
    ctx_cols = _gather_columns(words, ctx_idx)       # (D, C)
    tgt_cols = _gather_columns(tree, tgt_idx)        # (D, T)
    context_mean = jnp.sum(ctx_cols, axis=1) / C     # (D,)
    return jax.nn.sigmoid(context_mean @ tgt_cols)   # (T,)


def kmer2vec_ref(words, tree, ctx_idx, tgt_idx):
    # Pure-JAX reference mirroring the PyTorch forward.
    context_items = jnp.take_along_axis(words, ctx_idx, axis=1)
    context_mean = jnp.mean(context_items, axis=1)
    target_tree_items = jnp.take_along_axis(tree, tgt_idx, axis=1)
    return jax.nn.sigmoid(context_mean @ target_tree_items)


if __name__ == "__main__":
    embedding_dim = 32     # D
    vocab_size = 2000      # V (deliberately NOT a multiple of 128 -> padded)
    context_width = 8      # C
    num_targets = 8        # T

    key = jax.random.PRNGKey(0)
    k_words, k_tree, k_ctx, k_tgt, k_cu, k_tu = jax.random.split(key, 6)

    # Module __init__: words = randn(D, V); tree = zeros(D, V).  A small
    # random tree keeps the test non-degenerate (all-zeros tree -> output 0.5).
    words = jax.random.normal(k_words, (embedding_dim, vocab_size), jnp.float32)
    tree = 0.1 * jax.random.normal(k_tree, (embedding_dim, vocab_size),
                                   jnp.float32)

    # --- general per-row torch.gather indices (full-scan kernel) ------------
    ctx_idx = jax.random.randint(
        k_ctx, (embedding_dim, context_width), 0, vocab_size, dtype=jnp.int32)
    tgt_idx = jax.random.randint(
        k_tgt, (embedding_dim, num_targets), 0, vocab_size, dtype=jnp.int32)

    ref = jax.block_until_ready(kmer2vec_ref(words, tree, ctx_idx, tgt_idx))

    # Explicit small tile -> exercises padding, both grid axes and the
    # cross-tile accumulation; default tile -> exercises the auto planner.
    out_tiled = jax.block_until_ready(
        kmer2vec_forward(words, tree, ctx_idx, tgt_idx, tile_v=512))
    out_auto = jax.block_until_ready(
        kmer2vec_forward(words, tree, ctx_idx, tgt_idx))

    assert out_tiled.shape == (num_targets,)
    assert jnp.allclose(out_tiled, ref, atol=1e-5, rtol=1e-5), (out_tiled, ref)
    assert jnp.allclose(out_auto, ref, atol=1e-5, rtol=1e-5), (out_auto, ref)

    # --- column-uniform (CBOW) indices: scalar-prefetch gather fast path ----
    ctx_u = jax.random.randint(k_cu, (context_width,), 0, vocab_size,
                               dtype=jnp.int32)
    tgt_u = jax.random.randint(k_tu, (num_targets,), 0, vocab_size,
                               dtype=jnp.int32)

    ref_u = jax.block_until_ready(kmer2vec_ref(
        words, tree,
        jnp.broadcast_to(ctx_u, (embedding_dim, context_width)),
        jnp.broadcast_to(tgt_u, (embedding_dim, num_targets))))
    out_u = jax.block_until_ready(
        kmer2vec_forward_uniform(words, tree, ctx_u, tgt_u))

    assert out_u.shape == (num_targets,)
    assert jnp.allclose(out_u, ref_u, atol=1e-5, rtol=1e-5), (out_u, ref_u)

    print("KERNEL_OK")
</pallas_src>

<mosaic_0001>
module attributes {stable_mosaic.version = 11 : i64} {
  func.func @_kmer2vec_scan_kernel(%arg0: i32, %arg1: i32, %arg2: memref<32x8xi32, #tpu.memory_space<vmem>>, %arg3: memref<32x8xi32, #tpu.memory_space<vmem>>, %arg4: memref<32x512xf32, #tpu.memory_space<vmem>>, %arg5: memref<32x512xf32, #tpu.memory_space<vmem>>, %arg6: memref<1x32x1xf32, #tpu.memory_space<vmem>>, %arg7: memref<1x32x8xf32, #tpu.memory_space<vmem>>) attributes {dimension_semantics = [#tpu.dimension_semantics<parallel>, #tpu.dimension_semantics<arbitrary>], iteration_bounds = array<i64: 2, 2>, scalar_prefetch = 0 : i64, scratch_operands = 0 : i64, tpu.core_type = #tpu.core_type<tc>, window_params = [{pipeline_mode = #tpu.pipeline_mode<synchronous>, transform_indices = @transform_0, window_bounds = array<i64: 32, 8>}, {pipeline_mode = #tpu.pipeline_mode<synchronous>, transform_indices = @transform_1, window_bounds = array<i64: 32, 8>}, {transform_indices = @transform_2, window_bounds = array<i64: 32, 512>}, {transform_indices = @transform_3, window_bounds = array<i64: 32, 512>}, {transform_indices = @transform_4, window_bounds = array<i64: 1, 32, 1>}, {transform_indices = @transform_5, window_bounds = array<i64: 1, 32, 8>}]} {
    %c0_i32 = arith.constant 0 : i32
    %0 = arith.cmpi eq, %arg1, %c0_i32 : i32
    %1 = arith.extui %0 : i1 to i32
    %c0_i32_0 = arith.constant 0 : i32
    %2 = arith.cmpi ne, %1, %c0_i32_0 : i32
    scf.if %2 {
      %cst_85 = arith.constant 0.000000e+00 : f32
      %400 = vector.broadcast %cst_85 : f32 to vector<1x32x1xf32>
      %c0_86 = arith.constant 0 : index
      %c0_87 = arith.constant 0 : index
      %c0_88 = arith.constant 0 : index
      %401 = vector.load %arg6[%c0_86, %c0_87, %c0_88] : memref<1x32x1xf32, #tpu.memory_space<vmem>>, vector<1x32x1xf32>
      tpu.vector_store %arg6[%c0_86, %c0_87, %c0_88], %400 {strides = array<i32>} : memref<1x32x1xf32, #tpu.memory_space<vmem>>, vector<1x32x1xf32>,
      %cst_89 = arith.constant 0.000000e+00 : f32
      %402 = vector.broadcast %cst_89 : f32 to vector<1x32x8xf32>
      %c0_90 = arith.constant 0 : index
      %c0_91 = arith.constant 0 : index
      %c0_92 = arith.constant 0 : index
      %403 = vector.load %arg7[%c0_90, %c0_91, %c0_92] : memref<1x32x8xf32, #tpu.memory_space<vmem>>, vector<1x32x8xf32>
      tpu.vector_store %arg7[%c0_90, %c0_91, %c0_92], %402 {strides = array<i32>} : memref<1x32x8xf32, #tpu.memory_space<vmem>>, vector<1x32x8xf32>,
    } else {
    }
    %c2_i32 = arith.constant 2 : i32
    %3 = arith.muli %arg0, %c2_i32 : i32
    %4 = arith.addi %3, %arg1 : i32
    %c512_i32 = arith.constant 512 : i32
    %5 = arith.muli %4, %c512_i32 : i32
    %c0 = arith.constant 0 : index
    %c0_1 = arith.constant 0 : index
    %6 = vector.load %arg2[%c0, %c0_1] : memref<32x8xi32, #tpu.memory_space<vmem>>, vector<32x8xi32>
    %c0_2 = arith.constant 0 : index
    %c0_3 = arith.constant 0 : index
    %7 = vector.load %arg3[%c0_2, %c0_3] : memref<32x8xi32, #tpu.memory_space<vmem>>, vector<32x8xi32>
    %8 = tpu.iota {dimensions = array<i32: 1>} : vector<32x256xi32>
    %9 = tpu.iota {dimensions = array<i32: 1>} : vector<1x8xi32>
    %cst = arith.constant 0.000000e+00 : f32
    %10 = vector.broadcast %cst : f32 to vector<32x1xf32>
    %cst_4 = arith.constant 0.000000e+00 : f32
    %11 = vector.broadcast %cst_4 : f32 to vector<32x8xf32>
    %c0_i32_5 = arith.constant 0 : i32
    %c256_i32 = arith.constant 256 : i32
    %12 = arith.muli %c0_i32_5, %c256_i32 : i32
    %13 = tpu.assume_multiple %12, 256 : i32
    %c0_6 = arith.constant 0 : index
    %14 = arith.index_cast %13 : i32 to index
    %15 = vector.load %arg4[%c0_6, %14] : memref<32x512xf32, #tpu.memory_space<vmem>>, vector<32x256xf32>
    %c0_7 = arith.constant 0 : index
    %16 = arith.index_cast %13 : i32 to index
    %17 = vector.load %arg5[%c0_7, %16] : memref<32x512xf32, #tpu.memory_space<vmem>>, vector<32x256xf32>
    %18 = arith.addi %5, %13 : i32
    %19 = vector.broadcast %18 : i32 to vector<32x8xi32>
    %20 = arith.subi %6, %19 : vector<32x8xi32>
    %21 = vector.extract_strided_slice %20 {offsets = [0, 0], sizes = [32, 1], strides = [1, 1]} : vector<32x8xi32> to vector<32x1xi32>
    %22 = vector.broadcast %21 : vector<32x1xi32> to vector<32x256xi32>
    %23 = arith.cmpi eq, %8, %22 : vector<32x256xi32>
    %24 = arith.extui %23 : vector<32x256xi1> to vector<32x256xi32>
    %25 = arith.sitofp %24 : vector<32x256xi32> to vector<32x256xf32>
    %26 = vector.extract_strided_slice %20 {offsets = [0, 1], sizes = [32, 1], strides = [1, 1]} : vector<32x8xi32> to vector<32x1xi32>
    %27 = vector.broadcast %26 : vector<32x1xi32> to vector<32x256xi32>
    %28 = arith.cmpi eq, %8, %27 : vector<32x256xi32>
    %29 = arith.extui %28 : vector<32x256xi1> to vector<32x256xi32>
    %30 = arith.sitofp %29 : vector<32x256xi32> to vector<32x256xf32>
    %31 = arith.addf %25, %30 : vector<32x256xf32>
    %32 = vector.extract_strided_slice %20 {offsets = [0, 2], sizes = [32, 1], strides = [1, 1]} : vector<32x8xi32> to vector<32x1xi32>
    %33 = vector.broadcast %32 : vector<32x1xi32> to vector<32x256xi32>
    %34 = arith.cmpi eq, %8, %33 : vector<32x256xi32>
    %35 = arith.extui %34 : vector<32x256xi1> to vector<32x256xi32>
    %36 = arith.sitofp %35 : vector<32x256xi32> to vector<32x256xf32>
    %37 = arith.addf %31, %36 : vector<32x256xf32>
    %38 = vector.extract_strided_slice %20 {offsets = [0, 3], sizes = [32, 1], strides = [1, 1]} : vector<32x8xi32> to vector<32x1xi32>
    %39 = vector.broadcast %38 : vector<32x1xi32> to vector<32x256xi32>
    %40 = arith.cmpi eq, %8, %39 : vector<32x256xi32>
    %41 = arith.extui %40 : vector<32x256xi1> to vector<32x256xi32>
    %42 = arith.sitofp %41 : vector<32x256xi32> to vector<32x256xf32>
    %43 = arith.addf %37, %42 : vector<32x256xf32>
    %44 = vector.extract_strided_slice %20 {offsets = [0, 4], sizes = [32, 1], strides = [1, 1]} : vector<32x8xi32> to vector<32x1xi32>
    %45 = vector.broadcast %44 : vector<32x1xi32> to vector<32x256xi32>
    %46 = arith.cmpi eq, %8, %45 : vector<32x256xi32>
    %47 = arith.extui %46 : vector<32x256xi1> to vector<32x256xi32>
    %48 = arith.sitofp %47 : vector<32x256xi32> to vector<32x256xf32>
    %49 = arith.addf %43, %48 : vector<32x256xf32>
    %50 = vector.extract_strided_slice %20 {offsets = [0, 5], sizes = [32, 1], strides = [1, 1]} : vector<32x8xi32> to vector<32x1xi32>
    %51 = vector.broadcast %50 : vector<32x1xi32> to vector<32x256xi32>
    %52 = arith.cmpi eq, %8, %51 : vector<32x256xi32>
    %53 = arith.extui %52 : vector<32x256xi1> to vector<32x256xi32>
    %54 = arith.sitofp %53 : vector<32x256xi32> to vector<32x256xf32>
    %55 = arith.addf %49, %54 : vector<32x256xf32>
    %56 = vector.extract_strided_slice %20 {offsets = [0, 6], sizes = [32, 1], strides = [1, 1]} : vector<32x8xi32> to vector<32x1xi32>
    %57 = vector.broadcast %56 : vector<32x1xi32> to vector<32x256xi32>
    %58 = arith.cmpi eq, %8, %57 : vector<32x256xi32>
    %59 = arith.extui %58 : vector<32x256xi1> to vector<32x256xi32>
    %60 = arith.sitofp %59 : vector<32x256xi32> to vector<32x256xf32>
    %61 = arith.addf %55, %60 : vector<32x256xf32>
    %62 = vector.extract_strided_slice %20 {offsets = [0, 7], sizes = [32, 1], strides = [1, 1]} : vector<32x8xi32> to vector<32x1xi32>
    %63 = vector.broadcast %62 : vector<32x1xi32> to vector<32x256xi32>
    %64 = arith.cmpi eq, %8, %63 : vector<32x256xi32>
    %65 = arith.extui %64 : vector<32x256xi1> to vector<32x256xi32>
    %66 = arith.sitofp %65 : vector<32x256xi32> to vector<32x256xf32>
    %67 = arith.addf %61, %66 : vector<32x256xf32>
    %68 = arith.mulf %15, %67 : vector<32x256xf32>
    %cst_8 = arith.constant dense<0.000000e+00> : vector<32xf32>
    %69 = vector.multi_reduction <add>, %68, %cst_8 [1] : vector<32x256xf32> to vector<32xf32>
    %70 = vector.shape_cast %69 : vector<32xf32> to vector<32x1xf32>
    %71 = arith.addf %10, %70 : vector<32x1xf32>
    %72 = vector.broadcast %18 : i32 to vector<32x8xi32>
    %73 = arith.subi %7, %72 : vector<32x8xi32>
    %74 = vector.extract_strided_slice %73 {offsets = [0, 0], sizes = [32, 1], strides = [1, 1]} : vector<32x8xi32> to vector<32x1xi32>
    %75 = vector.broadcast %74 : vector<32x1xi32> to vector<32x256xi32>
    %76 = arith.cmpi eq, %8, %75 : vector<32x256xi32>
    %cst_9 = arith.constant 0.000000e+00 : f32
    %77 = vector.broadcast %cst_9 : f32 to vector<32x256xf32>
    %78 = arith.select %76, %17, %77 : vector<32x256xi1>, vector<32x256xf32>
    %cst_10 = arith.constant dense<0.000000e+00> : vector<32xf32>
    %79 = vector.multi_reduction <add>, %78, %cst_10 [1] : vector<32x256xf32> to vector<32xf32>
    %80 = vector.shape_cast %79 : vector<32xf32> to vector<32x1xf32>
    %c0_i32_11 = arith.constant 0 : i32
    %81 = vector.broadcast %c0_i32_11 : i32 to vector<1x8xi32>
    %82 = arith.cmpi eq, %9, %81 : vector<1x8xi32>
    %cst_12 = arith.constant 0.000000e+00 : f32
    %83 = vector.shape_cast %82 : vector<1x8xi1> to vector<1x8xi1>
    %84 = vector.broadcast %83 : vector<1x8xi1> to vector<32x8xi1>
    %85 = vector.shape_cast %80 : vector<32x1xf32> to vector<32x1xf32>
    %86 = vector.broadcast %85 : vector<32x1xf32> to vector<32x8xf32>
    %87 = vector.broadcast %cst_12 : f32 to vector<32x8xf32>
    %88 = arith.select %84, %86, %87 : vector<32x8xi1>, vector<32x8xf32>
    %89 = arith.addf %11, %88 : vector<32x8xf32>
    %90 = vector.extract_strided_slice %73 {offsets = [0, 1], sizes = [32, 1], strides = [1, 1]} : vector<32x8xi32> to vector<32x1xi32>
    %91 = vector.broadcast %90 : vector<32x1xi32> to vector<32x256xi32>
    %92 = arith.cmpi eq, %8, %91 : vector<32x256xi32>
    %cst_13 = arith.constant 0.000000e+00 : f32
    %93 = vector.broadcast %cst_13 : f32 to vector<32x256xf32>
    %94 = arith.select %92, %17, %93 : vector<32x256xi1>, vector<32x256xf32>
    %cst_14 = arith.constant dense<0.000000e+00> : vector<32xf32>
    %95 = vector.multi_reduction <add>, %94, %cst_14 [1] : vector<32x256xf32> to vector<32xf32>
    %96 = vector.shape_cast %95 : vector<32xf32> to vector<32x1xf32>
    %c1_i32 = arith.constant 1 : i32
    %97 = vector.broadcast %c1_i32 : i32 to vector<1x8xi32>
    %98 = arith.cmpi eq, %9, %97 : vector<1x8xi32>
    %cst_15 = arith.constant 0.000000e+00 : f32
    %99 = vector.shape_cast %98 : vector<1x8xi1> to vector<1x8xi1>
    %100 = vector.broadcast %99 : vector<1x8xi1> to vector<32x8xi1>
    %101 = vector.shape_cast %96 : vector<32x1xf32> to vector<32x1xf32>
    %102 = vector.broadcast %101 : vector<32x1xf32> to vector<32x8xf32>
    %103 = vector.broadcast %cst_15 : f32 to vector<32x8xf32>
    %104 = arith.select %100, %102, %103 : vector<32x8xi1>, vector<32x8xf32>
    %105 = arith.addf %89, %104 : vector<32x8xf32>
    %106 = vector.extract_strided_slice %73 {offsets = [0, 2], sizes = [32, 1], strides = [1, 1]} : vector<32x8xi32> to vector<32x1xi32>
    %107 = vector.broadcast %106 : vector<32x1xi32> to vector<32x256xi32>
    %108 = arith.cmpi eq, %8, %107 : vector<32x256xi32>
    %cst_16 = arith.constant 0.000000e+00 : f32
    %109 = vector.broadcast %cst_16 : f32 to vector<32x256xf32>
    %110 = arith.select %108, %17, %109 : vector<32x256xi1>, vector<32x256xf32>
    %cst_17 = arith.constant dense<0.000000e+00> : vector<32xf32>
    %111 = vector.multi_reduction <add>, %110, %cst_17 [1] : vector<32x256xf32> to vector<32xf32>
    %112 = vector.shape_cast %111 : vector<32xf32> to vector<32x1xf32>
    %c2_i32_18 = arith.constant 2 : i32
    %113 = vector.broadcast %c2_i32_18 : i32 to vector<1x8xi32>
    %114 = arith.cmpi eq, %9, %113 : vector<1x8xi32>
    %cst_19 = arith.constant 0.000000e+00 : f32
    %115 = vector.shape_cast %114 : vector<1x8xi1> to vector<1x8xi1>
    %116 = vector.broadcast %115 : vector<1x8xi1> to vector<32x8xi1>
    %117 = vector.shape_cast %112 : vector<32x1xf32> to vector<32x1xf32>
    %118 = vector.broadcast %117 : vector<32x1xf32> to vector<32x8xf32>
    %119 = vector.broadcast %cst_19 : f32 to vector<32x8xf32>
    %120 = arith.select %116, %118, %119 : vector<32x8xi1>, vector<32x8xf32>
    %121 = arith.addf %105, %120 : vector<32x8xf32>
    %122 = vector.extract_strided_slice %73 {offsets = [0, 3], sizes = [32, 1], strides = [1, 1]} : vector<32x8xi32> to vector<32x1xi32>
    %123 = vector.broadcast %122 : vector<32x1xi32> to vector<32x256xi32>
    %124 = arith.cmpi eq, %8, %123 : vector<32x256xi32>
    %cst_20 = arith.constant 0.000000e+00 : f32
    %125 = vector.broadcast %cst_20 : f32 to vector<32x256xf32>
    %126 = arith.select %124, %17, %125 : vector<32x256xi1>, vector<32x256xf32>
    %cst_21 = arith.constant dense<0.000000e+00> : vector<32xf32>
    %127 = vector.multi_reduction <add>, %126, %cst_21 [1] : vector<32x256xf32> to vector<32xf32>
    %128 = vector.shape_cast %127 : vector<32xf32> to vector<32x1xf32>
    %c3_i32 = arith.constant 3 : i32
    %129 = vector.broadcast %c3_i32 : i32 to vector<1x8xi32>
    %130 = arith.cmpi eq, %9, %129 : vector<1x8xi32>
    %cst_22 = arith.constant 0.000000e+00 : f32
    %131 = vector.shape_cast %130 : vector<1x8xi1> to vector<1x8xi1>
    %132 = vector.broadcast %131 : vector<1x8xi1> to vector<32x8xi1>
    %133 = vector.shape_cast %128 : vector<32x1xf32> to vector<32x1xf32>
    %134 = vector.broadcast %133 : vector<32x1xf32> to vector<32x8xf32>
    %135 = vector.broadcast %cst_22 : f32 to vector<32x8xf32>
    %136 = arith.select %132, %134, %135 : vector<32x8xi1>, vector<32x8xf32>
    %137 = arith.addf %121, %136 : vector<32x8xf32>
    %138 = vector.extract_strided_slice %73 {offsets = [0, 4], sizes = [32, 1], strides = [1, 1]} : vector<32x8xi32> to vector<32x1xi32>
    %139 = vector.broadcast %138 : vector<32x1xi32> to vector<32x256xi32>
    %140 = arith.cmpi eq, %8, %139 : vector<32x256xi32>
    %cst_23 = arith.constant 0.000000e+00 : f32
    %141 = vector.broadcast %cst_23 : f32 to vector<32x256xf32>
    %142 = arith.select %140, %17, %141 : vector<32x256xi1>, vector<32x256xf32>
    %cst_24 = arith.constant dense<0.000000e+00> : vector<32xf32>
    %143 = vector.multi_reduction <add>, %142, %cst_24 [1] : vector<32x256xf32> to vector<32xf32>
    %144 = vector.shape_cast %143 : vector<32xf32> to vector<32x1xf32>
    %c4_i32 = arith.constant 4 : i32
    %145 = vector.broadcast %c4_i32 : i32 to vector<1x8xi32>
    %146 = arith.cmpi eq, %9, %145 : vector<1x8xi32>
    %cst_25 = arith.constant 0.000000e+00 : f32
    %147 = vector.shape_cast %146 : vector<1x8xi1> to vector<1x8xi1>
    %148 = vector.broadcast %147 : vector<1x8xi1> to vector<32x8xi1>
    %149 = vector.shape_cast %144 : vector<32x1xf32> to vector<32x1xf32>
    %150 = vector.broadcast %149 : vector<32x1xf32> to vector<32x8xf32>
    %151 = vector.broadcast %cst_25 : f32 to vector<32x8xf32>
    %152 = arith.select %148, %150, %151 : vector<32x8xi1>, vector<32x8xf32>
    %153 = arith.addf %137, %152 : vector<32x8xf32>
    %154 = vector.extract_strided_slice %73 {offsets = [0, 5], sizes = [32, 1], strides = [1, 1]} : vector<32x8xi32> to vector<32x1xi32>
    %155 = vector.broadcast %154 : vector<32x1xi32> to vector<32x256xi32>
    %156 = arith.cmpi eq, %8, %155 : vector<32x256xi32>
    %cst_26 = arith.constant 0.000000e+00 : f32
    %157 = vector.broadcast %cst_26 : f32 to vector<32x256xf32>
    %158 = arith.select %156, %17, %157 : vector<32x256xi1>, vector<32x256xf32>
    %cst_27 = arith.constant dense<0.000000e+00> : vector<32xf32>
    %159 = vector.multi_reduction <add>, %158, %cst_27 [1] : vector<32x256xf32> to vector<32xf32>
    %160 = vector.shape_cast %159 : vector<32xf32> to vector<32x1xf32>
    %c5_i32 = arith.constant 5 : i32
    %161 = vector.broadcast %c5_i32 : i32 to vector<1x8xi32>
    %162 = arith.cmpi eq, %9, %161 : vector<1x8xi32>
    %cst_28 = arith.constant 0.000000e+00 : f32
    %163 = vector.shape_cast %162 : vector<1x8xi1> to vector<1x8xi1>
    %164 = vector.broadcast %163 : vector<1x8xi1> to vector<32x8xi1>
    %165 = vector.shape_cast %160 : vector<32x1xf32> to vector<32x1xf32>
    %166 = vector.broadcast %165 : vector<32x1xf32> to vector<32x8xf32>
    %167 = vector.broadcast %cst_28 : f32 to vector<32x8xf32>
    %168 = arith.select %164, %166, %167 : vector<32x8xi1>, vector<32x8xf32>
    %169 = arith.addf %153, %168 : vector<32x8xf32>
    %170 = vector.extract_strided_slice %73 {offsets = [0, 6], sizes = [32, 1], strides = [1, 1]} : vector<32x8xi32> to vector<32x1xi32>
    %171 = vector.broadcast %170 : vector<32x1xi32> to vector<32x256xi32>
    %172 = arith.cmpi eq, %8, %171 : vector<32x256xi32>
    %cst_29 = arith.constant 0.000000e+00 : f32
    %173 = vector.broadcast %cst_29 : f32 to vector<32x256xf32>
    %174 = arith.select %172, %17, %173 : vector<32x256xi1>, vector<32x256xf32>
    %cst_30 = arith.constant dense<0.000000e+00> : vector<32xf32>
    %175 = vector.multi_reduction <add>, %174, %cst_30 [1] : vector<32x256xf32> to vector<32xf32>
    %176 = vector.shape_cast %175 : vector<32xf32> to vector<32x1xf32>
    %c6_i32 = arith.constant 6 : i32
    %177 = vector.broadcast %c6_i32 : i32 to vector<1x8xi32>
    %178 = arith.cmpi eq, %9, %177 : vector<1x8xi32>
    %cst_31 = arith.constant 0.000000e+00 : f32
    %179 = vector.shape_cast %178 : vector<1x8xi1> to vector<1x8xi1>
    %180 = vector.broadcast %179 : vector<1x8xi1> to vector<32x8xi1>
    %181 = vector.shape_cast %176 : vector<32x1xf32> to vector<32x1xf32>
    %182 = vector.broadcast %181 : vector<32x1xf32> to vector<32x8xf32>
    %183 = vector.broadcast %cst_31 : f32 to vector<32x8xf32>
    %184 = arith.select %180, %182, %183 : vector<32x8xi1>, vector<32x8xf32>
    %185 = arith.addf %169, %184 : vector<32x8xf32>
    %186 = vector.extract_strided_slice %73 {offsets = [0, 7], sizes = [32, 1], strides = [1, 1]} : vector<32x8xi32> to vector<32x1xi32>
    %187 = vector.broadcast %186 : vector<32x1xi32> to vector<32x256xi32>
    %188 = arith.cmpi eq, %8, %187 : vector<32x256xi32>
    %cst_32 = arith.constant 0.000000e+00 : f32
    %189 = vector.broadcast %cst_32 : f32 to vector<32x256xf32>
    %190 = arith.select %188, %17, %189 : vector<32x256xi1>, vector<32x256xf32>
    %cst_33 = arith.constant dense<0.000000e+00> : vector<32xf32>
    %191 = vector.multi_reduction <add>, %190, %cst_33 [1] : vector<32x256xf32> to vector<32xf32>
    %192 = vector.shape_cast %191 : vector<32xf32> to vector<32x1xf32>
    %c7_i32 = arith.constant 7 : i32
    %193 = vector.broadcast %c7_i32 : i32 to vector<1x8xi32>
    %194 = arith.cmpi eq, %9, %193 : vector<1x8xi32>
    %cst_34 = arith.constant 0.000000e+00 : f32
    %195 = vector.shape_cast %194 : vector<1x8xi1> to vector<1x8xi1>
    %196 = vector.broadcast %195 : vector<1x8xi1> to vector<32x8xi1>
    %197 = vector.shape_cast %192 : vector<32x1xf32> to vector<32x1xf32>
    %198 = vector.broadcast %197 : vector<32x1xf32> to vector<32x8xf32>
    %199 = vector.broadcast %cst_34 : f32 to vector<32x8xf32>
    %200 = arith.select %196, %198, %199 : vector<32x8xi1>, vector<32x8xf32>
    %201 = arith.addf %185, %200 : vector<32x8xf32>
    %c1_i32_35 = arith.constant 1 : i32
    %c256_i32_36 = arith.constant 256 : i32
    %202 = arith.muli %c1_i32_35, %c256_i32_36 : i32
    %203 = tpu.assume_multiple %202, 256 : i32
    %c0_37 = arith.constant 0 : index
    %204 = arith.index_cast %203 : i32 to index
    %205 = vector.load %arg4[%c0_37, %204] : memref<32x512xf32, #tpu.memory_space<vmem>>, vector<32x256xf32>
    %c0_38 = arith.constant 0 : index
    %206 = arith.index_cast %203 : i32 to index
    %207 = vector.load %arg5[%c0_38, %206] : memref<32x512xf32, #tpu.memory_space<vmem>>, vector<32x256xf32>
    %208 = arith.addi %5, %203 : i32
    %209 = vector.broadcast %208 : i32 to vector<32x8xi32>
    %210 = arith.subi %6, %209 : vector<32x8xi32>
    %211 = vector.extract_strided_slice %210 {offsets = [0, 0], sizes = [32, 1], strides = [1, 1]} : vector<32x8xi32> to vector<32x1xi32>
    %212 = vector.broadcast %211 : vector<32x1xi32> to vector<32x256xi32>
    %213 = arith.cmpi eq, %8, %212 : vector<32x256xi32>
    %214 = arith.extui %213 : vector<32x256xi1> to vector<32x256xi32>
    %215 = arith.sitofp %214 : vector<32x256xi32> to vector<32x256xf32>
    %216 = vector.extract_strided_slice %210 {offsets = [0, 1], sizes = [32, 1], strides = [1, 1]} : vector<32x8xi32> to vector<32x1xi32>
    %217 = vector.broadcast %216 : vector<32x1xi32> to vector<32x256xi32>
    %218 = arith.cmpi eq, %8, %217 : vector<32x256xi32>
    %219 = arith.extui %218 : vector<32x256xi1> to vector<32x256xi32>
    %220 = arith.sitofp %219 : vector<32x256xi32> to vector<32x256xf32>
    %221 = arith.addf %215, %220 : vector<32x256xf32>
    %222 = vector.extract_strided_slice %210 {offsets = [0, 2], sizes = [32, 1], strides = [1, 1]} : vector<32x8xi32> to vector<32x1xi32>
    %223 = vector.broadcast %222 : vector<32x1xi32> to vector<32x256xi32>
    %224 = arith.cmpi eq, %8, %223 : vector<32x256xi32>
    %225 = arith.extui %224 : vector<32x256xi1> to vector<32x256xi32>
    %226 = arith.sitofp %225 : vector<32x256xi32> to vector<32x256xf32>
    %227 = arith.addf %221, %226 : vector<32x256xf32>
    %228 = vector.extract_strided_slice %210 {offsets = [0, 3], sizes = [32, 1], strides = [1, 1]} : vector<32x8xi32> to vector<32x1xi32>
    %229 = vector.broadcast %228 : vector<32x1xi32> to vector<32x256xi32>
    %230 = arith.cmpi eq, %8, %229 : vector<32x256xi32>
    %231 = arith.extui %230 : vector<32x256xi1> to vector<32x256xi32>
    %232 = arith.sitofp %231 : vector<32x256xi32> to vector<32x256xf32>
    %233 = arith.addf %227, %232 : vector<32x256xf32>
    %234 = vector.extract_strided_slice %210 {offsets = [0, 4], sizes = [32, 1], strides = [1, 1]} : vector<32x8xi32> to vector<32x1xi32>
    %235 = vector.broadcast %234 : vector<32x1xi32> to vector<32x256xi32>
    %236 = arith.cmpi eq, %8, %235 : vector<32x256xi32>
    %237 = arith.extui %236 : vector<32x256xi1> to vector<32x256xi32>
    %238 = arith.sitofp %237 : vector<32x256xi32> to vector<32x256xf32>
    %239 = arith.addf %233, %238 : vector<32x256xf32>
    %240 = vector.extract_strided_slice %210 {offsets = [0, 5], sizes = [32, 1], strides = [1, 1]} : vector<32x8xi32> to vector<32x1xi32>
    %241 = vector.broadcast %240 : vector<32x1xi32> to vector<32x256xi32>
    %242 = arith.cmpi eq, %8, %241 : vector<32x256xi32>
    %243 = arith.extui %242 : vector<32x256xi1> to vector<32x256xi32>
    %244 = arith.sitofp %243 : vector<32x256xi32> to vector<32x256xf32>
    %245 = arith.addf %239, %244 : vector<32x256xf32>
    %246 = vector.extract_strided_slice %210 {offsets = [0, 6], sizes = [32, 1], strides = [1, 1]} : vector<32x8xi32> to vector<32x1xi32>
    %247 = vector.broadcast %246 : vector<32x1xi32> to vector<32x256xi32>
    %248 = arith.cmpi eq, %8, %247 : vector<32x256xi32>
    %249 = arith.extui %248 : vector<32x256xi1> to vector<32x256xi32>
    %250 = arith.sitofp %249 : vector<32x256xi32> to vector<32x256xf32>
    %251 = arith.addf %245, %250 : vector<32x256xf32>
    %252 = vector.extract_strided_slice %210 {offsets = [0, 7], sizes = [32, 1], strides = [1, 1]} : vector<32x8xi32> to vector<32x1xi32>
    %253 = vector.broadcast %252 : vector<32x1xi32> to vector<32x256xi32>
    %254 = arith.cmpi eq, %8, %253 : vector<32x256xi32>
    %255 = arith.extui %254 : vector<32x256xi1> to vector<32x256xi32>
    %256 = arith.sitofp %255 : vector<32x256xi32> to vector<32x256xf32>
    %257 = arith.addf %251, %256 : vector<32x256xf32>
    %258 = arith.mulf %205, %257 : vector<32x256xf32>
    %cst_39 = arith.constant dense<0.000000e+00> : vector<32xf32>
    %259 = vector.multi_reduction <add>, %258, %cst_39 [1] : vector<32x256xf32> to vector<32xf32>
    %260 = vector.shape_cast %259 : vector<32xf32> to vector<32x1xf32>
    %261 = arith.addf %71, %260 : vector<32x1xf32>
    %262 = vector.broadcast %208 : i32 to vector<32x8xi32>
    %263 = arith.subi %7, %262 : vector<32x8xi32>
    %264 = vector.extract_strided_slice %263 {offsets = [0, 0], sizes = [32, 1], strides = [1, 1]} : vector<32x8xi32> to vector<32x1xi32>
    %265 = vector.broadcast %264 : vector<32x1xi32> to vector<32x256xi32>
    %266 = arith.cmpi eq, %8, %265 : vector<32x256xi32>
    %cst_40 = arith.constant 0.000000e+00 : f32
    %267 = vector.broadcast %cst_40 : f32 to vector<32x256xf32>
    %268 = arith.select %266, %207, %267 : vector<32x256xi1>, vector<32x256xf32>
    %cst_41 = arith.constant dense<0.000000e+00> : vector<32xf32>
    %269 = vector.multi_reduction <add>, %268, %cst_41 [1] : vector<32x256xf32> to vector<32xf32>
    %270 = vector.shape_cast %269 : vector<32xf32> to vector<32x1xf32>
    %c0_i32_42 = arith.constant 0 : i32
    %271 = vector.broadcast %c0_i32_42 : i32 to vector<1x8xi32>
    %272 = arith.cmpi eq, %9, %271 : vector<1x8xi32>
    %cst_43 = arith.constant 0.000000e+00 : f32
    %273 = vector.shape_cast %272 : vector<1x8xi1> to vector<1x8xi1>
    %274 = vector.broadcast %273 : vector<1x8xi1> to vector<32x8xi1>
    %275 = vector.shape_cast %270 : vector<32x1xf32> to vector<32x1xf32>
    %276 = vector.broadcast %275 : vector<32x1xf32> to vector<32x8xf32>
    %277 = vector.broadcast %cst_43 : f32 to vector<32x8xf32>
    %278 = arith.select %274, %276, %277 : vector<32x8xi1>, vector<32x8xf32>
    %279 = arith.addf %201, %278 : vector<32x8xf32>
    %280 = vector.extract_strided_slice %263 {offsets = [0, 1], sizes = [32, 1], strides = [1, 1]} : vector<32x8xi32> to vector<32x1xi32>
    %281 = vector.broadcast %280 : vector<32x1xi32> to vector<32x256xi32>
    %282 = arith.cmpi eq, %8, %281 : vector<32x256xi32>
    %cst_44 = arith.constant 0.000000e+00 : f32
    %283 = vector.broadcast %cst_44 : f32 to vector<32x256xf32>
    %284 = arith.select %282, %207, %283 : vector<32x256xi1>, vector<32x256xf32>
    %cst_45 = arith.constant dense<0.000000e+00> : vector<32xf32>
    %285 = vector.multi_reduction <add>, %284, %cst_45 [1] : vector<32x256xf32> to vector<32xf32>
    %286 = vector.shape_cast %285 : vector<32xf32> to vector<32x1xf32>
    %c1_i32_46 = arith.constant 1 : i32
    %287 = vector.broadcast %c1_i32_46 : i32 to vector<1x8xi32>
    %288 = arith.cmpi eq, %9, %287 : vector<1x8xi32>
    %cst_47 = arith.constant 0.000000e+00 : f32
    %289 = vector.shape_cast %288 : vector<1x8xi1> to vector<1x8xi1>
    %290 = vector.broadcast %289 : vector<1x8xi1> to vector<32x8xi1>
    %291 = vector.shape_cast %286 : vector<32x1xf32> to vector<32x1xf32>
    %292 = vector.broadcast %291 : vector<32x1xf32> to vector<32x8xf32>
    %293 = vector.broadcast %cst_47 : f32 to vector<32x8xf32>
    %294 = arith.select %290, %292, %293 : vector<32x8xi1>, vector<32x8xf32>
    %295 = arith.addf %279, %294 : vector<32x8xf32>
    %296 = vector.extract_strided_slice %263 {offsets = [0, 2], sizes = [32, 1], strides = [1, 1]} : vector<32x8xi32> to vector<32x1xi32>
    %297 = vector.broadcast %296 : vector<32x1xi32> to vector<32x256xi32>
    %298 = arith.cmpi eq, %8, %297 : vector<32x256xi32>
    %cst_48 = arith.constant 0.000000e+00 : f32
    %299 = vector.broadcast %cst_48 : f32 to vector<32x256xf32>
    %300 = arith.select %298, %207, %299 : vector<32x256xi1>, vector<32x256xf32>
    %cst_49 = arith.constant dense<0.000000e+00> : vector<32xf32>
    %301 = vector.multi_reduction <add>, %300, %cst_49 [1] : vector<32x256xf32> to vector<32xf32>
    %302 = vector.shape_cast %301 : vector<32xf32> to vector<32x1xf32>
    %c2_i32_50 = arith.constant 2 : i32
    %303 = vector.broadcast %c2_i32_50 : i32 to vector<1x8xi32>
    %304 = arith.cmpi eq, %9, %303 : vector<1x8xi32>
    %cst_51 = arith.constant 0.000000e+00 : f32
    %305 = vector.shape_cast %304 : vector<1x8xi1> to vector<1x8xi1>
    %306 = vector.broadcast %305 : vector<1x8xi1> to vector<32x8xi1>
    %307 = vector.shape_cast %302 : vector<32x1xf32> to vector<32x1xf32>
    %308 = vector.broadcast %307 : vector<32x1xf32> to vector<32x8xf32>
    %309 = vector.broadcast %cst_51 : f32 to vector<32x8xf32>
    %310 = arith.select %306, %308, %309 : vector<32x8xi1>, vector<32x8xf32>
    %311 = arith.addf %295, %310 : vector<32x8xf32>
    %312 = vector.extract_strided_slice %263 {offsets = [0, 3], sizes = [32, 1], strides = [1, 1]} : vector<32x8xi32> to vector<32x1xi32>
    %313 = vector.broadcast %312 : vector<32x1xi32> to vector<32x256xi32>
    %314 = arith.cmpi eq, %8, %313 : vector<32x256xi32>
    %cst_52 = arith.constant 0.000000e+00 : f32
    %315 = vector.broadcast %cst_52 : f32 to vector<32x256xf32>
    %316 = arith.select %314, %207, %315 : vector<32x256xi1>, vector<32x256xf32>
    %cst_53 = arith.constant dense<0.000000e+00> : vector<32xf32>
    %317 = vector.multi_reduction <add>, %316, %cst_53 [1] : vector<32x256xf32> to vector<32xf32>
    %318 = vector.shape_cast %317 : vector<32xf32> to vector<32x1xf32>
    %c3_i32_54 = arith.constant 3 : i32
    %319 = vector.broadcast %c3_i32_54 : i32 to vector<1x8xi32>
    %320 = arith.cmpi eq, %9, %319 : vector<1x8xi32>
    %cst_55 = arith.constant 0.000000e+00 : f32
    %321 = vector.shape_cast %320 : vector<1x8xi1> to vector<1x8xi1>
    %322 = vector.broadcast %321 : vector<1x8xi1> to vector<32x8xi1>
    %323 = vector.shape_cast %318 : vector<32x1xf32> to vector<32x1xf32>
    %324 = vector.broadcast %323 : vector<32x1xf32> to vector<32x8xf32>
    %325 = vector.broadcast %cst_55 : f32 to vector<32x8xf32>
    %326 = arith.select %322, %324, %325 : vector<32x8xi1>, vector<32x8xf32>
    %327 = arith.addf %311, %326 : vector<32x8xf32>
    %328 = vector.extract_strided_slice %263 {offsets = [0, 4], sizes = [32, 1], strides = [1, 1]} : vector<32x8xi32> to vector<32x1xi32>
    %329 = vector.broadcast %328 : vector<32x1xi32> to vector<32x256xi32>
    %330 = arith.cmpi eq, %8, %329 : vector<32x256xi32>
    %cst_56 = arith.constant 0.000000e+00 : f32
    %331 = vector.broadcast %cst_56 : f32 to vector<32x256xf32>
    %332 = arith.select %330, %207, %331 : vector<32x256xi1>, vector<32x256xf32>
    %cst_57 = arith.constant dense<0.000000e+00> : vector<32xf32>
    %333 = vector.multi_reduction <add>, %332, %cst_57 [1] : vector<32x256xf32> to vector<32xf32>
    %334 = vector.shape_cast %333 : vector<32xf32> to vector<32x1xf32>
    %c4_i32_58 = arith.constant 4 : i32
    %335 = vector.broadcast %c4_i32_58 : i32 to vector<1x8xi32>
    %336 = arith.cmpi eq, %9, %335 : vector<1x8xi32>
    %cst_59 = arith.constant 0.000000e+00 : f32
    %337 = vector.shape_cast %336 : vector<1x8xi1> to vector<1x8xi1>
    %338 = vector.broadcast %337 : vector<1x8xi1> to vector<32x8xi1>
    %339 = vector.shape_cast %334 : vector<32x1xf32> to vector<32x1xf32>
    %340 = vector.broadcast %339 : vector<32x1xf32> to vector<32x8xf32>
    %341 = vector.broadcast %cst_59 : f32 to vector<32x8xf32>
    %342 = arith.select %338, %340, %341 : vector<32x8xi1>, vector<32x8xf32>
    %343 = arith.addf %327, %342 : vector<32x8xf32>
    %344 = vector.extract_strided_slice %263 {offsets = [0, 5], sizes = [32, 1], strides = [1, 1]} : vector<32x8xi32> to vector<32x1xi32>
    %345 = vector.broadcast %344 : vector<32x1xi32> to vector<32x256xi32>
    %346 = arith.cmpi eq, %8, %345 : vector<32x256xi32>
    %cst_60 = arith.constant 0.000000e+00 : f32
    %347 = vector.broadcast %cst_60 : f32 to vector<32x256xf32>
    %348 = arith.select %346, %207, %347 : vector<32x256xi1>, vector<32x256xf32>
    %cst_61 = arith.constant dense<0.000000e+00> : vector<32xf32>
    %349 = vector.multi_reduction <add>, %348, %cst_61 [1] : vector<32x256xf32> to vector<32xf32>
    %350 = vector.shape_cast %349 : vector<32xf32> to vector<32x1xf32>
    %c5_i32_62 = arith.constant 5 : i32
    %351 = vector.broadcast %c5_i32_62 : i32 to vector<1x8xi32>
    %352 = arith.cmpi eq, %9, %351 : vector<1x8xi32>
    %cst_63 = arith.constant 0.000000e+00 : f32
    %353 = vector.shape_cast %352 : vector<1x8xi1> to vector<1x8xi1>
    %354 = vector.broadcast %353 : vector<1x8xi1> to vector<32x8xi1>
    %355 = vector.shape_cast %350 : vector<32x1xf32> to vector<32x1xf32>
    %356 = vector.broadcast %355 : vector<32x1xf32> to vector<32x8xf32>
    %357 = vector.broadcast %cst_63 : f32 to vector<32x8xf32>
    %358 = arith.select %354, %356, %357 : vector<32x8xi1>, vector<32x8xf32>
    %359 = arith.addf %343, %358 : vector<32x8xf32>
    %360 = vector.extract_strided_slice %263 {offsets = [0, 6], sizes = [32, 1], strides = [1, 1]} : vector<32x8xi32> to vector<32x1xi32>
    %361 = vector.broadcast %360 : vector<32x1xi32> to vector<32x256xi32>
    %362 = arith.cmpi eq, %8, %361 : vector<32x256xi32>
    %cst_64 = arith.constant 0.000000e+00 : f32
    %363 = vector.broadcast %cst_64 : f32 to vector<32x256xf32>
    %364 = arith.select %362, %207, %363 : vector<32x256xi1>, vector<32x256xf32>
    %cst_65 = arith.constant dense<0.000000e+00> : vector<32xf32>
    %365 = vector.multi_reduction <add>, %364, %cst_65 [1] : vector<32x256xf32> to vector<32xf32>
    %366 = vector.shape_cast %365 : vector<32xf32> to vector<32x1xf32>
    %c6_i32_66 = arith.constant 6 : i32
    %367 = vector.broadcast %c6_i32_66 : i32 to vector<1x8xi32>
    %368 = arith.cmpi eq, %9, %367 : vector<1x8xi32>
    %cst_67 = arith.constant 0.000000e+00 : f32
    %369 = vector.shape_cast %368 : vector<1x8xi1> to vector<1x8xi1>
    %370 = vector.broadcast %369 : vector<1x8xi1> to vector<32x8xi1>
    %371 = vector.shape_cast %366 : vector<32x1xf32> to vector<32x1xf32>
    %372 = vector.broadcast %371 : vector<32x1xf32> to vector<32x8xf32>
    %373 = vector.broadcast %cst_67 : f32 to vector<32x8xf32>
    %374 = arith.select %370, %372, %373 : vector<32x8xi1>, vector<32x8xf32>
    %375 = arith.addf %359, %374 : vector<32x8xf32>
    %376 = vector.extract_strided_slice %263 {offsets = [0, 7], sizes = [32, 1], strides = [1, 1]} : vector<32x8xi32> to vector<32x1xi32>
    %377 = vector.broadcast %376 : vector<32x1xi32> to vector<32x256xi32>
    %378 = arith.cmpi eq, %8, %377 : vector<32x256xi32>
    %cst_68 = arith.constant 0.000000e+00 : f32
    %379 = vector.broadcast %cst_68 : f32 to vector<32x256xf32>
    %380 = arith.select %378, %207, %379 : vector<32x256xi1>, vector<32x256xf32>
    %cst_69 = arith.constant dense<0.000000e+00> : vector<32xf32>
    %381 = vector.multi_reduction <add>, %380, %cst_69 [1] : vector<32x256xf32> to vector<32xf32>
    %382 = vector.shape_cast %381 : vector<32xf32> to vector<32x1xf32>
    %c7_i32_70 = arith.constant 7 : i32
    %383 = vector.broadcast %c7_i32_70 : i32 to vector<1x8xi32>
    %384 = arith.cmpi eq, %9, %383 : vector<1x8xi32>
    %cst_71 = arith.constant 0.000000e+00 : f32
    %385 = vector.shape_cast %384 : vector<1x8xi1> to vector<1x8xi1>
    %386 = vector.broadcast %385 : vector<1x8xi1> to vector<32x8xi1>
    %387 = vector.shape_cast %382 : vector<32x1xf32> to vector<32x1xf32>
    %388 = vector.broadcast %387 : vector<32x1xf32> to vector<32x8xf32>
    %389 = vector.broadcast %cst_71 : f32 to vector<32x8xf32>
    %390 = arith.select %386, %388, %389 : vector<32x8xi1>, vector<32x8xf32>
    %391 = arith.addf %375, %390 : vector<32x8xf32>
    %c2_i32_72 = arith.constant 2 : i32
    %c0_73 = arith.constant 0 : index
    %c0_74 = arith.constant 0 : index
    %c0_75 = arith.constant 0 : index
    %392 = vector.load %arg6[%c0_73, %c0_74, %c0_75] : memref<1x32x1xf32, #tpu.memory_space<vmem>>, vector<1x32x1xf32>
    %393 = vector.shape_cast %261 : vector<32x1xf32> to vector<1x32x1xf32>
    %394 = arith.addf %392, %393 : vector<1x32x1xf32>
    %c0_76 = arith.constant 0 : index
    %c0_77 = arith.constant 0 : index
    %c0_78 = arith.constant 0 : index
    %395 = vector.load %arg6[%c0_76, %c0_77, %c0_78] : memref<1x32x1xf32, #tpu.memory_space<vmem>>, vector<1x32x1xf32>
    tpu.vector_store %arg6[%c0_76, %c0_77, %c0_78], %394 {strides = array<i32>} : memref<1x32x1xf32, #tpu.memory_space<vmem>>, vector<1x32x1xf32>,
    %c0_79 = arith.constant 0 : index
    %c0_80 = arith.constant 0 : index
    %c0_81 = arith.constant 0 : index
    %396 = vector.load %arg7[%c0_79, %c0_80, %c0_81] : memref<1x32x8xf32, #tpu.memory_space<vmem>>, vector<1x32x8xf32>
    %397 = vector.shape_cast %391 : vector<32x8xf32> to vector<1x32x8xf32>
    %398 = arith.addf %396, %397 : vector<1x32x8xf32>
    %c0_82 = arith.constant 0 : index
    %c0_83 = arith.constant 0 : index
    %c0_84 = arith.constant 0 : index
    %399 = vector.load %arg7[%c0_82, %c0_83, %c0_84] : memref<1x32x8xf32, #tpu.memory_space<vmem>>, vector<1x32x8xf32>
    tpu.vector_store %arg7[%c0_82, %c0_83, %c0_84], %398 {strides = array<i32>} : memref<1x32x8xf32, #tpu.memory_space<vmem>>, vector<1x32x8xf32>,
    return
  }
  func.func @transform_0(%arg0: i32, %arg1: i32) -> (i32, i32) {
    %c0_i32 = arith.constant 0 : i32
    %c0_i32_0 = arith.constant 0 : i32
    %c0_i32_1 = arith.constant 0 : i32
    return %c0_i32, %c0_i32_0 : i32, i32
  }
  func.func @transform_1(%arg0: i32, %arg1: i32) -> (i32, i32) {
    %c0_i32 = arith.constant 0 : i32
    %c0_i32_0 = arith.constant 0 : i32
    %c0_i32_1 = arith.constant 0 : i32
    return %c0_i32, %c0_i32_0 : i32, i32
  }
  func.func @transform_2(%arg0: i32, %arg1: i32) -> (i32, i32) {
    %c2_i32 = arith.constant 2 : i32
    %0 = arith.muli %arg0, %c2_i32 : i32
    %1 = arith.addi %0, %arg1 : i32
    %c0_i32 = arith.constant 0 : i32
    %c0_i32_0 = arith.constant 0 : i32
    return %c0_i32, %1 : i32, i32
  }
  func.func @transform_3(%arg0: i32, %arg1: i32) -> (i32, i32) {
    %c2_i32 = arith.constant 2 : i32
    %0 = arith.muli %arg0, %c2_i32 : i32
    %1 = arith.addi %0, %arg1 : i32
    %c0_i32 = arith.constant 0 : i32
    %c0_i32_0 = arith.constant 0 : i32
    return %c0_i32, %1 : i32, i32
  }
  func.func @transform_4(%arg0: i32, %arg1: i32) -> (i32, i32, i32) {
    %c0_i32 = arith.constant 0 : i32
    %c0_i32_0 = arith.constant 0 : i32
    %c0_i32_1 = arith.constant 0 : i32
    return %arg0, %c0_i32, %c0_i32_0 : i32, i32, i32
  }
  func.func @transform_5(%arg0: i32, %arg1: i32) -> (i32, i32, i32) {
    %c0_i32 = arith.constant 0 : i32
    %c0_i32_0 = arith.constant 0 : i32
    %c0_i32_1 = arith.constant 0 : i32
    return %arg0, %c0_i32, %c0_i32_0 : i32, i32, i32
  }
}

</mosaic_0001>

<llo_original>
// kernel: kmer2vec_forward.1
$region0: #{kmer2vec_forward.1}
  #allocation0 [shape = 'u32[]', space=smem, size = 0x4, offset = 0x4, fixed_abs, tag = 'smem constant byte address 0x4 - core index']
  #allocation1 [shape = 'u32[72,128]{1,0:T(1,128)}', space=vmem, size = 0x9000, scoped, tag = 'internal scratch']
  %s0 = inlined_call_operand.vmem [shape: s32[32,8], index: 0, kind: input, shape index: {}]
  %s1 = inlined_call_operand.vmem [shape: s32[32,8], index: 1, kind: input, shape index: {}]
  %s2 = inlined_call_operand.vmem [shape: f32[32,2048], index: 2, kind: input, shape index: {}]
  %s3 = inlined_call_operand.vmem [shape: f32[32,2048], index: 3, kind: input, shape index: {}]
  %s4 = inlined_call_operand.vmem [shape: f32[2,32,1], index: 4, kind: output, shape index: {0}]
  %s5 = inlined_call_operand.vmem [shape: f32[2,32,8], index: 5, kind: output, shape index: {1}]
  %6 = xla_tuple %s4, %s5
  %s7 = sld [smem:[#allocation0]]
  $region107: #{kmer2vec_forward.1} parent=0
    _
  %s9 = ssub.s32 1, %s7
  %s10 = scalar_select 0, %s9, %s7
  $region1: #{kmer2vec_forward.1} parent=0
    #allocation2 [shape = 'u8[131072]{0}', space=vmem, size = 0x20000, scoped, tag = 'input window, operand 2']
    #allocation3 [shape = 'u8[131072]{0}', space=vmem, size = 0x20000, scoped, tag = 'input window, operand 3']
    loop: start=0, step=1, limit=6
    $region2: #{kmer2vec_forward.1} parent=1 // loop_pre_header
      _
    $region3: #{kmer2vec_forward.1} parent=1 // loop_header
      %s12 = sphi 0, %s16
      %p13 = scmp.ge.s32.totalorder %s12, 6
      %s19 = sphi 0, %s31
      %s20 = sphi 0, %s27
      %s21 = sphi 0, %s19
      %s22 = sphi 0, %s20
      %s23 = sphi 0, %s21
      %s24 = sphi 0, %s22
      %s32 = sphi 0, %s32
      %s34 = sphi 0, %s32
      %s35 = sphi 0, %s34
      %s49 = sphi 0, %s35
      %s53 = sphi 0, %s53
      %s55 = sphi 0, %s53
      %s56 = sphi 0, %s55
      %s70 = sphi 0, %s56
      %s80 = sphi 0, %s82
      %s83 = sphi 0, %s80
      %s84 = sphi 0, %s83
      %s100 = sphi 0, %s84
      %s110 = sphi 0, %s112
      %s113 = sphi 0, %s110
      %s114 = sphi 0, %s113
      %s130 = sphi 0, %s114
      %s136 = sphi 0, %s138
      %s139 = sphi 0, %s136
      %s140 = sphi 0, %s139
      %s156 = sphi 0, %s140
      %s162 = sphi 0, %s164
      %s165 = sphi 0, %s162
      %s166 = sphi 0, %s165
      %s182 = sphi 0, %s166
    $region4: #{kmer2vec_forward.1} parent=1 // loop_header_branch
      %15 = sbr.rel (%p13) target = $region8
    $region5: #{kmer2vec_forward.1} parent=1 // loop_body
      %s17 = ssub.s32 %s12, 1
      %s18 = ssub.s32 %s12, 2
      %s25 = sadd.s32 1, %s20
      %p26 = scmp.ge.s32.totalorder %s25, 2
      %s27 = scalar_select %p26, 0, %s25
      %s28 = sadd.s32 1, %s19
      %s29 = scalar_select %p26, %s28, %s19
      %p30 = scmp.ge.s32.totalorder %s29, 2
      %s31 = scalar_select %p30, 0, %s29
      %s33 = sadd.s32 %s32, 1
      %p36 = scmp.eq.s32.totalorder %s12, 3
      %p37 = scmp.ne.s32.totalorder %s32, %s34
      %p38 = scmp.eq.s32.totalorder %s12, 0
      %p39 = por %p37, %p38
      %p40 = scmp.ne.s32.totalorder %s32, %s34
      %p41 = scmp.eq.s32.totalorder %s17, 3
      %p42 = por %p40, %p41
      %p43 = scmp.ne.s32.totalorder %s34, %s35
      %p44 = scmp.eq.s32.totalorder %s17, 0
      %p45 = por %p43, %p44
      %p46 = scmp.ne.s32.totalorder %s34, %s35
      %p47 = scmp.eq.s32.totalorder %s18, 3
      %p48 = por %p46, %p47
      %p50 = scmp.ne.s32.totalorder %s35, %s49
      %p51 = scmp.eq.s32.totalorder %s18, 0
      %p52 = por %p50, %p51
      %s54 = sadd.s32 %s53, 1
      %p57 = scmp.eq.s32.totalorder %s12, 3
      %p58 = scmp.ne.s32.totalorder %s53, %s55
      %p59 = scmp.eq.s32.totalorder %s12, 0
      %p60 = por %p58, %p59
      %p61 = scmp.ne.s32.totalorder %s53, %s55
      %p62 = scmp.eq.s32.totalorder %s17, 3
      %p63 = por %p61, %p62
      %p64 = scmp.ne.s32.totalorder %s55, %s56
      %p65 = scmp.eq.s32.totalorder %s17, 0
      %p66 = por %p64, %p65
      %p67 = scmp.ne.s32.totalorder %s55, %s56
      %p68 = scmp.eq.s32.totalorder %s18, 3
      %p69 = por %p67, %p68
      %p71 = scmp.ne.s32.totalorder %s56, %s70
      %p72 = scmp.eq.s32.totalorder %s18, 0
      %p73 = por %p71, %p72
      %s74 = smul.u32 %s19, 2
      %s75 = sadd.s32 %s74, %s20
      %s76 = smul.u32 %s31, 2
      %s77 = sadd.s32 %s76, %s27
      %s78 = ssub.s32 %s75, %s77
      %p79 = scmp.eq.s32.totalorder %s78, 0
      %s81 = sadd.s32 %s80, 1
      %s82 = scalar_select %p79, %s80, %s81
      %p85 = pneg %p79
      %p86 = scmp.eq.s32.totalorder %s12, 3
      %p87 = por %p85, %p86
      %p88 = scmp.ne.s32.totalorder %s80, %s83
      %p89 = scmp.eq.s32.totalorder %s12, 0
      %p90 = por %p88, %p89
      %p91 = scmp.ne.s32.totalorder %s80, %s83
      %p92 = scmp.eq.s32.totalorder %s17, 3
      %p93 = por %p91, %p92
      %p94 = scmp.ne.s32.totalorder %s83, %s84
      %p95 = scmp.eq.s32.totalorder %s17, 0
      %p96 = por %p94, %p95
      %p97 = scmp.ne.s32.totalorder %s83, %s84
      %p98 = scmp.eq.s32.totalorder %s18, 3
      %p99 = por %p97, %p98
      %p101 = scmp.ne.s32.totalorder %s84, %s100
      %p102 = scmp.eq.s32.totalorder %s18, 0
      %p103 = por %p101, %p102
      %s104 = smul.u32 %s19, 2
      %s105 = sadd.s32 %s104, %s20
      %s106 = smul.u32 %s31, 2
      %s107 = sadd.s32 %s106, %s27
      %s108 = ssub.s32 %s105, %s107
      %p109 = scmp.eq.s32.totalorder %s108, 0
      %s111 = sadd.s32 %s110, 1
      %s112 = scalar_select %p109, %s110, %s111
      %p115 = pneg %p109
      %p116 = scmp.eq.s32.totalorder %s12, 3
      %p117 = por %p115, %p116
      %p118 = scmp.ne.s32.totalorder %s110, %s113
      %p119 = scmp.eq.s32.totalorder %s12, 0
      %p120 = por %p118, %p119
      %p121 = scmp.ne.s32.totalorder %s110, %s113
      %p122 = scmp.eq.s32.totalorder %s17, 3
      %p123 = por %p121, %p122
      %p124 = scmp.ne.s32.totalorder %s113, %s114
      %p125 = scmp.eq.s32.totalorder %s17, 0
      %p126 = por %p124, %p125
      %p127 = scmp.ne.s32.totalorder %s113, %s114
      %p128 = scmp.eq.s32.totalorder %s18, 3
      %p129 = por %p127, %p128
      %p131 = scmp.ne.s32.totalorder %s114, %s130
      %p132 = scmp.eq.s32.totalorder %s18, 0
      %p133 = por %p131, %p132
      %s134 = ssub.s32 %s19, %s31
      %p135 = scmp.eq.s32.totalorder %s134, 0
      %s137 = sadd.s32 %s136, 1
      %s138 = scalar_select %p135, %s136, %s137
      %p141 = pneg %p135
      %p142 = scmp.eq.s32.totalorder %s12, 3
      %p143 = por %p141, %p142
      %p144 = scmp.ne.s32.totalorder %s136, %s139
      %p145 = scmp.eq.s32.totalorder %s12, 0
      %p146 = por %p144, %p145
      %p147 = scmp.ne.s32.totalorder %s136, %s139
      %p148 = scmp.eq.s32.totalorder %s17, 3
      %p149 = por %p147, %p148
      %p150 = scmp.ne.s32.totalorder %s139, %s140
      %p151 = scmp.eq.s32.totalorder %s17, 0
      %p152 = por %p150, %p151
      %p153 = scmp.ne.s32.totalorder %s139, %s140
      %p154 = scmp.eq.s32.totalorder %s18, 3
      %p155 = por %p153, %p154
      %p157 = scmp.ne.s32.totalorder %s140, %s156
      %p158 = scmp.eq.s32.totalorder %s18, 0
      %p159 = por %p157, %p158
      %s160 = ssub.s32 %s19, %s31
      %p161 = scmp.eq.s32.totalorder %s160, 0
      %s163 = sadd.s32 %s162, 1
      %s164 = scalar_select %p161, %s162, %s163
      %p167 = pneg %p161
      %p168 = scmp.eq.s32.totalorder %s12, 3
      %p169 = por %p167, %p168
      %p170 = scmp.ne.s32.totalorder %s162, %s165
      %p171 = scmp.eq.s32.totalorder %s12, 0
      %p172 = por %p170, %p171
      %p173 = scmp.ne.s32.totalorder %s162, %s165
      %p174 = scmp.eq.s32.totalorder %s17, 3
      %p175 = por %p173, %p174
      %p176 = scmp.ne.s32.totalorder %s165, %s166
      %p177 = scmp.eq.s32.totalorder %s17, 0
      %p178 = por %p176, %p177
      %p179 = scmp.ne.s32.totalorder %s165, %s166
      %p180 = scmp.eq.s32.totalorder %s18, 3
      %p181 = por %p179, %p180
      %p183 = scmp.ne.s32.totalorder %s166, %s182
      %p184 = scmp.eq.s32.totalorder %s18, 0
      %p185 = por %p183, %p184
      %p186 = scmp.le.s32.totalorder 1, %s12
      %p187 = scmp.lt.s32.totalorder %s12, 5
      %p188 = pnand %p186, %p187
      %p189 = pneg %p188
      // Predicated region
      $region9: #{kmer2vec_forward.1} parent=5 // pred_check
        _
      $region10: #{kmer2vec_forward.1} parent=5 // pred_check_branch
        %191 = sbr.rel (%p188) target = $region12
      $region11: #{kmer2vec_forward.1} parent=5 // pred_region
        %s192 = ssub.s32 %s12, 1
        // Predicated region
        $region13: #{kmer2vec_forward.1} parent=11 // pred_check
          %p193 = pneg %p45
        $region14: #{kmer2vec_forward.1} parent=11 // pred_check_branch
          %195 = sbr.rel (%p193) target = $region16
        $region15: #{kmer2vec_forward.1} parent=11 // pred_region
          _
        $region16: #{kmer2vec_forward.1} parent=11 // pred_fallthru
          _
        // Predicated region
        $region17: #{kmer2vec_forward.1} parent=11 // pred_check
          %p196 = pneg %p66
        $region18: #{kmer2vec_forward.1} parent=11 // pred_check_branch
          %198 = sbr.rel (%p196) target = $region20
        $region19: #{kmer2vec_forward.1} parent=11 // pred_region
          _
        $region20: #{kmer2vec_forward.1} parent=11 // pred_fallthru
          _
      $region12: #{kmer2vec_forward.1} parent=5 // pred_fallthru
        _
      %p199 = scmp.lt.s32.totalorder %s12, 4
      // Predicated region
      $region21: #{kmer2vec_forward.1} parent=5 // pred_check
        %p200 = pneg %p199
      $region22: #{kmer2vec_forward.1} parent=5 // pred_check_branch
        %202 = sbr.rel (%p200) target = $region24
      $region23: #{kmer2vec_forward.1} parent=5 // pred_region
        // Predicated region
        $region25: #{kmer2vec_forward.1} parent=23 // pred_check
          %p203 = pneg %p90
        $region26: #{kmer2vec_forward.1} parent=23 // pred_check_branch
          %205 = sbr.rel (%p203) target = $region28
        $region27: #{kmer2vec_forward.1} parent=23 // pred_region
          %s206 = sand.u32 %s80, 1
          %s207 = sand.u32 %s80, 1
          %s208 = smul.addr %s207, 128
          %s209 = scalar_lea.vmem [#allocation2], %s208
          %s210 = smul.u32 %s19, 2
          %s211 = sadd.s32 %s210, %s20
          %s212 = smul.u32 4, %s211
          %s213 = smul.addr %s212, 8
          %s214 = scalar_lea.vmem %s2, %s213
          // Predicated region
          $region29: #{kmer2vec_forward.1} parent=27 // pred_check
            _
          $region30: #{kmer2vec_forward.1} parent=27 // pred_check_branch
            %216 = sbr.rel (0) target = $region32
          $region31: #{kmer2vec_forward.1} parent=27 // pred_region
            // Predicated region
            $region33: #{kmer2vec_forward.1} parent=31 // pred_check
              _
            $region34: #{kmer2vec_forward.1} parent=31 // pred_check_branch
              %218 = sbr.rel (0) target = $region36
            $region35: #{kmer2vec_forward.1} parent=31 // pred_region
              loop: start=0, step=1, limit=1
              $region37: #{kmer2vec_forward.1} parent=35 // loop_pre_header
                _
              $region38: #{kmer2vec_forward.1} parent=35 // loop_header
                %s220 = sphi 0, %s224
                %p221 = scmp.ge.s32.totalorder %s220, 1
                %s225 = sphi %s214, %s214
                %s226 = sphi %s209, %s209
              $region39: #{kmer2vec_forward.1} parent=35 // loop_header_branch
                %223 = sbr.rel (%p221) target = $region43
              $region40: #{kmer2vec_forward.1} parent=35 // loop_body
                %v227 = vld [vmem:[%s225] sm:$0xff]
                %228 = vst [vmem:[%s226] sm:$0xff] %v227
                %v229 = vld [vmem:[%s225 + $0x8] sm:$0xff]
                %230 = vst [vmem:[%s226 + $0x8] sm:$0xff] %v229
                %v231 = vld [vmem:[%s225 + $0x10] sm:$0xff]
                %232 = vst [vmem:[%s226 + $0x10] sm:$0xff] %v231
                %v233 = vld [vmem:[%s225 + $0x18] sm:$0xff]
                %234 = vst [vmem:[%s226 + $0x18] sm:$0xff] %v233
                %v235 = vld [vmem:[%s225 + $0x80] sm:$0xff]
                %236 = vst [vmem:[%s226 + $0x20] sm:$0xff] %v235
                %v237 = vld [vmem:[%s225 + $0x88] sm:$0xff]
                %238 = vst [vmem:[%s226 + $0x28] sm:$0xff] %v237
                %v239 = vld [vmem:[%s225 + $0x90] sm:$0xff]
                %240 = vst [vmem:[%s226 + $0x30] sm:$0xff] %v239
                %v241 = vld [vmem:[%s225 + $0x98] sm:$0xff]
                %242 = vst [vmem:[%s226 + $0x38] sm:$0xff] %v241
                %v243 = vld [vmem:[%s225 + $0x100] sm:$0xff]
                %244 = vst [vmem:[%s226 + $0x40] sm:$0xff] %v243
                %v245 = vld [vmem:[%s225 + $0x108] sm:$0xff]
                %246 = vst [vmem:[%s226 + $0x48] sm:$0xff] %v245
                %v247 = vld [vmem:[%s225 + $0x110] sm:$0xff]
                %248 = vst [vmem:[%s226 + $0x50] sm:$0xff] %v247
                %v249 = vld [vmem:[%s225 + $0x118] sm:$0xff]
                %250 = vst [vmem:[%s226 + $0x58] sm:$0xff] %v249
                %v251 = vld [vmem:[%s225 + $0x180] sm:$0xff]
                %252 = vst [vmem:[%s226 + $0x60] sm:$0xff] %v251
                %v253 = vld [vmem:[%s225 + $0x188] sm:$0xff]
                %254 = vst [vmem:[%s226 + $0x68] sm:$0xff] %v253
                %v255 = vld [vmem:[%s225 + $0x190] sm:$0xff]
                %256 = vst [vmem:[%s226 + $0x70] sm:$0xff] %v255
                %v257 = vld [vmem:[%s225 + $0x198] sm:$0xff]
                %258 = vst [vmem:[%s226 + $0x78] sm:$0xff] %v257
              $region41: #{kmer2vec_forward.1} parent=35 // loop_footer
                %s224 = sadd.s32 1, %s220
              $region42: #{kmer2vec_forward.1} parent=35 // loop_footer_branch
                %219 = sbr.rel target = $region38
              $region43: #{kmer2vec_forward.1} parent=35 // loop_exit
                _
            $region36: #{kmer2vec_forward.1} parent=31 // pred_fallthru
              _
            // Predicated region
            $region44: #{kmer2vec_forward.1} parent=31 // pred_check
              _
            $region45: #{kmer2vec_forward.1} parent=31 // pred_check_branch
              %260 = sbr.rel target = $region47
            $region46: #{kmer2vec_forward.1} parent=31 // pred_region
              _
            $region47: #{kmer2vec_forward.1} parent=31 // pred_fallthru
              _
          $region32: #{kmer2vec_forward.1} parent=27 // pred_fallthru
            _
          %261 = vnop
        $region28: #{kmer2vec_forward.1} parent=23 // pred_fallthru
          _
        // Predicated region
        $region48: #{kmer2vec_forward.1} parent=23 // pred_check
          %p262 = pneg %p120
        $region49: #{kmer2vec_forward.1} parent=23 // pred_check_branch
          %264 = sbr.rel (%p262) target = $region51
        $region50: #{kmer2vec_forward.1} parent=23 // pred_region
          %s265 = sand.u32 %s110, 1
          %s266 = sand.u32 %s110, 1
          %s267 = smul.addr %s266, 128
          %s268 = scalar_lea.vmem [#allocation3], %s267
          %s269 = smul.u32 %s19, 2
          %s270 = sadd.s32 %s269, %s20
          %s271 = smul.u32 4, %s270
          %s272 = smul.addr %s271, 8
          %s273 = scalar_lea.vmem %s3, %s272
          // Predicated region
          $region52: #{kmer2vec_forward.1} parent=50 // pred_check
            _
          $region53: #{kmer2vec_forward.1} parent=50 // pred_check_branch
            %275 = sbr.rel (0) target = $region55
          $region54: #{kmer2vec_forward.1} parent=50 // pred_region
            // Predicated region
            $region56: #{kmer2vec_forward.1} parent=54 // pred_check
              _
            $region57: #{kmer2vec_forward.1} parent=54 // pred_check_branch
              %277 = sbr.rel (0) target = $region59
            $region58: #{kmer2vec_forward.1} parent=54 // pred_region
              loop: start=0, step=1, limit=1
              $region60: #{kmer2vec_forward.1} parent=58 // loop_pre_header
                _
              $region61: #{kmer2vec_forward.1} parent=58 // loop_header
                %s279 = sphi 0, %s283
                %p280 = scmp.ge.s32.totalorder %s279, 1
                %s284 = sphi %s273, %s273
                %s285 = sphi %s268, %s268
              $region62: #{kmer2vec_forward.1} parent=58 // loop_header_branch
                %282 = sbr.rel (%p280) target = $region66
              $region63: #{kmer2vec_forward.1} parent=58 // loop_body
                %v286 = vld [vmem:[%s284] sm:$0xff]
                %287 = vst [vmem:[%s285] sm:$0xff] %v286
                %v288 = vld [vmem:[%s284 + $0x8] sm:$0xff]
                %289 = vst [vmem:[%s285 + $0x8] sm:$0xff] %v288
                %v290 = vld [vmem:[%s284 + $0x10] sm:$0xff]
                %291 = vst [vmem:[%s285 + $0x10] sm:$0xff] %v290
                %v292 = vld [vmem:[%s284 + $0x18] sm:$0xff]
                %293 = vst [vmem:[%s285 + $0x18] sm:$0xff] %v292
                %v294 = vld [vmem:[%s284 + $0x80] sm:$0xff]
                %295 = vst [vmem:[%s285 + $0x20] sm:$0xff] %v294
                %v296 = vld [vmem:[%s284 + $0x88] sm:$0xff]
                %297 = vst [vmem:[%s285 + $0x28] sm:$0xff] %v296
                %v298 = vld [vmem:[%s284 + $0x90] sm:$0xff]
                %299 = vst [vmem:[%s285 + $0x30] sm:$0xff] %v298
                %v300 = vld [vmem:[%s284 + $0x98] sm:$0xff]
                %301 = vst [vmem:[%s285 + $0x38] sm:$0xff] %v300
                %v302 = vld [vmem:[%s284 + $0x100] sm:$0xff]
                %303 = vst [vmem:[%s285 + $0x40] sm:$0xff] %v302
                %v304 = vld [vmem:[%s284 + $0x108] sm:$0xff]
                %305 = vst [vmem:[%s285 + $0x48] sm:$0xff] %v304
                %v306 = vld [vmem:[%s284 + $0x110] sm:$0xff]
                %307 = vst [vmem:[%s285 + $0x50] sm:$0xff] %v306
                %v308 = vld [vmem:[%s284 + $0x118] sm:$0xff]
                %309 = vst [vmem:[%s285 + $0x58] sm:$0xff] %v308
                %v310 = vld [vmem:[%s284 + $0x180] sm:$0xff]
                %311 = vst [vmem:[%s285 + $0x60] sm:$0xff] %v310
                %v312 = vld [vmem:[%s284 + $0x188] sm:$0xff]
                %313 = vst [vmem:[%s285 + $0x68] sm:$0xff] %v312
                %v314 = vld [vmem:[%s284 + $0x190] sm:$0xff]
                %315 = vst [vmem:[%s285 + $0x70] sm:$0xff] %v314
                %v316 = vld [vmem:[%s284 + $0x198] sm:$0xff]
                %317 = vst [vmem:[%s285 + $0x78] sm:$0xff] %v316
              $region64: #{kmer2vec_forward.1} parent=58 // loop_footer
                %s283 = sadd.s32 1, %s279
              $region65: #{kmer2vec_forward.1} parent=58 // loop_footer_branch
                %278 = sbr.rel target = $region61
              $region66: #{kmer2vec_forward.1} parent=58 // loop_exit
                _
            $region59: #{kmer2vec_forward.1} parent=54 // pred_fallthru
              _
            // Predicated region
            $region67: #{kmer2vec_forward.1} parent=54 // pred_check
              _
            $region68: #{kmer2vec_forward.1} parent=54 // pred_check_branch
              %319 = sbr.rel target = $region70
            $region69: #{kmer2vec_forward.1} parent=54 // pred_region
              _
            $region70: #{kmer2vec_forward.1} parent=54 // pred_fallthru
              _
          $region55: #{kmer2vec_forward.1} parent=50 // pred_fallthru
            _
          %320 = vnop
        $region51: #{kmer2vec_forward.1} parent=23 // pred_fallthru
          _
      $region24: #{kmer2vec_forward.1} parent=5 // pred_fallthru
        _
      %p321 = scmp.le.s32.totalorder 1, %s12
      %p322 = scmp.lt.s32.totalorder %s12, 5
      %p323 = pnand %p321, %p322
      %p324 = pneg %p323
      // Predicated region
      $region71: #{kmer2vec_forward.1} parent=5 // pred_check
        _
      $region72: #{kmer2vec_forward.1} parent=5 // pred_check_branch
        %326 = sbr.rel (%p323) target = $region74
      $region73: #{kmer2vec_forward.1} parent=5 // pred_region
        %s327 = ssub.s32 %s12, 1
        %s328 = sand.u32 %s83, 1
        %s329 = sand.u32 %s83, 1
        %s330 = smul.addr %s329, 128
        %s331 = scalar_lea.vmem [#allocation2], %s330
        // Predicated region
        $region75: #{kmer2vec_forward.1} parent=73 // pred_check
          %p332 = pneg %p96
        $region76: #{kmer2vec_forward.1} parent=73 // pred_check_branch
          %334 = sbr.rel (%p332) target = $region78
        $region77: #{kmer2vec_forward.1} parent=73 // pred_region
          _
        $region78: #{kmer2vec_forward.1} parent=73 // pred_fallthru
          _
        %s335 = sand.u32 %s113, 1
        %s336 = sand.u32 %s113, 1
        %s337 = smul.addr %s336, 128
        %s338 = scalar_lea.vmem [#allocation3], %s337
        // Predicated region
        $region79: #{kmer2vec_forward.1} parent=73 // pred_check
          %p339 = pneg %p126
        $region80: #{kmer2vec_forward.1} parent=73 // pred_check_branch
          %341 = sbr.rel (%p339) target = $region82
        $region81: #{kmer2vec_forward.1} parent=73 // pred_region
          _
        $region82: #{kmer2vec_forward.1} parent=73 // pred_fallthru
          _
        %p342 = pneg %p45
        %p343 = pneg %p42
        %p344 = pneg %p66
        %p345 = pneg %p63
        %s346 = sand.u32 %s83, 1
        %s347 = sand.u32 %s83, 1
        %s348 = smul.addr %s347, 128
        %s349 = scalar_lea.vmem [#allocation2], %s348
        %p350 = pneg %p96
        %p351 = pneg %p93
        %s352 = sand.u32 %s113, 1
        %s353 = sand.u32 %s113, 1
        %s354 = smul.addr %s353, 128
        %s355 = scalar_lea.vmem [#allocation3], %s354
        %p356 = pneg %p126
        %p357 = pneg %p123
        %p358 = pneg %p152
        %p359 = pneg %p149
        %p360 = scmp.lt.s32.totalorder %s21, 1
        %s361 = scalar_select %p360, %s21, 1
        %s362 = smul.addr %s361, 4
        %s363 = smul.addr %s362, 8
        %s364 = scalar_lea.vmem %s4, %s363
        %p365 = pneg %p178
        %p366 = pneg %p175
        %p367 = scmp.lt.s32.totalorder %s21, 1
        %s368 = scalar_select %p367, %s21, 1
        %s369 = smul.addr %s368, 4
        %s370 = smul.addr %s369, 8
        %s371 = scalar_lea.vmem %s5, %s370
        %s372 = smul.u32 %s21, 2
        %s373 = sadd.s32 %s372, %s22
        %s374 = smul.u32 4, %s373
        %s375 = smul.u32 %s21, 2
        %s376 = sadd.s32 %s375, %s22
        %s377 = smul.u32 4, %s376
        %p378 = scmp.lt.s32.totalorder %s21, 1
        %s379 = scalar_select %p378, %s21, 1
        %s380 = smul.addr %s379, 4
        %s381 = smul.addr %s380, 8
        %s382 = scalar_lea.vmem %s4, %s381
        %p383 = scmp.lt.s32.totalorder %s21, 1
        %s384 = scalar_select %p383, %s21, 1
        %s385 = smul.addr %s384, 4
        %s386 = smul.addr %s385, 8
        %s387 = scalar_lea.vmem %s5, %s386
        %p388 = scmp.eq.s32.totalorder %s22, 0
        // Predicated region
        $region83: #{kmer2vec_forward.1} parent=73 // pred_check
          %p389 = pneg %p388
        $region84: #{kmer2vec_forward.1} parent=73 // pred_check_branch
          %391 = sbr.rel (%p389) target = $region86
        $region85: #{kmer2vec_forward.1} parent=73 // pred_region
          %vm392 = vcmask 7168
          %393 = vst.msk [vmem:[%s382] sm:$0xff] %vm392, 0.0
          %394 = vst.msk [vmem:[%s382 + $0x8] sm:$0xff] %vm392, 0.0
          %395 = vst.msk [vmem:[%s382 + $0x10] sm:$0xff] %vm392, 0.0
          %396 = vst.msk [vmem:[%s382 + $0x18] sm:$0xff] %vm392, 0.0
          %vm397 = vcmask 64512
          %398 = vst.msk [vmem:[%s387] sm:$0xff] %vm397, 0.0
          %399 = vst.msk [vmem:[%s387 + $0x8] sm:$0xff] %vm397, 0.0
          %400 = vst.msk [vmem:[%s387 + $0x10] sm:$0xff] %vm397, 0.0
          %401 = vst.msk [vmem:[%s387 + $0x18] sm:$0xff] %vm397, 0.0
        $region86: #{kmer2vec_forward.1} parent=73 // pred_fallthru
          _
        %s402 = smul.u32 %s21, 2
        %s403 = sadd.s32 %s402, %s22
        %s404 = smul.u32 %s403, 512
        %v405 = vld [vmem:[%s0] sm:$0xff]
        %v406 = vld [vmem:[%s0 + $0x8] sm:$0xff]
        %v407 = vld [vmem:[%s0 + $0x10] sm:$0xff]
        %v408 = vld [vmem:[%s0 + $0x18] sm:$0xff]
        %v409 = vld [vmem:[%s1] sm:$0xff]
        %v410 = vld [vmem:[%s1 + $0x8] sm:$0xff]
        %v411 = vld [vmem:[%s1 + $0x10] sm:$0xff]
        %v412 = vld [vmem:[%s1 + $0x18] sm:$0xff]
        %v413 = vlaneseq
        %v414 = vand.u32 %v413, 127
        %v415 = vadd.s32 %v414, 128
        %v416 = vld [vmem:[%s331] sm:$0xff]
        %v417 = vld [vmem:[%s331 + $0x8] sm:$0xff]
        %v418 = vld [vmem:[%s331 + $0x20] sm:$0xff]
        %v419 = vld [vmem:[%s331 + $0x28] sm:$0xff]
        %v420 = vld [vmem:[%s331 + $0x40] sm:$0xff]
        %v421 = vld [vmem:[%s331 + $0x48] sm:$0xff]
        %v422 = vld [vmem:[%s331 + $0x60] sm:$0xff]
        %v423 = vld [vmem:[%s331 + $0x68] sm:$0xff]
        %v424 = vld [vmem:[%s338] sm:$0xff]
        %v425 = vld [vmem:[%s338 + $0x8] sm:$0xff]
        %v426 = vld [vmem:[%s338 + $0x20] sm:$0xff]
        %v427 = vld [vmem:[%s338 + $0x28] sm:$0xff]
        %v428 = vld [vmem:[%s338 + $0x40] sm:$0xff]
        %v429 = vld [vmem:[%s338 + $0x48] sm:$0xff]
        %v430 = vld [vmem:[%s338 + $0x60] sm:$0xff]
        %v431 = vld [vmem:[%s338 + $0x68] sm:$0xff]
        %s432 = sadd.s32 %s404, 0
        %v433 = vstv %s432
        %v434 = vsub.s32 %v405, %v433
        %v435 = vsub.s32 %v406, %v433
        %v436 = vsub.s32 %v407, %v433
        %v437 = vsub.s32 %v408, %v433
        %438 = vset.pattern.permute.xlu0 0
        %439 = vperm.xlu0 %438, %v434
        %v440 = vpop.permute.xlu0 %439
        %441 = vset.pattern.permute.xlu0 0
        %442 = vperm.xlu0 %441, %v435
        %v443 = vpop.permute.xlu0 %442
        %444 = vset.pattern.permute.xlu0 0
        %445 = vperm.xlu0 %444, %v436
        %v446 = vpop.permute.xlu0 %445
        %447 = vset.pattern.permute.xlu0 0
        %448 = vperm.xlu0 %447, %v437
        %v449 = vpop.permute.xlu0 %448
        %vm450 = vcmp.eq.s32.totalorder %v414, %v440
        %vm451 = vcmp.eq.s32.totalorder %v415, %v440
        %vm452 = vcmp.eq.s32.totalorder %v414, %v443
        %vm453 = vcmp.eq.s32.totalorder %v415, %v443
        %vm454 = vcmp.eq.s32.totalorder %v414, %v446
        %vm455 = vcmp.eq.s32.totalorder %v415, %v446
        %vm456 = vcmp.eq.s32.totalorder %v414, %v449
        %vm457 = vcmp.eq.s32.totalorder %v415, %v449
        %v458 = vsel %vm450, 1, 0
        %v459 = vsel %vm451, 1, 0
        %v460 = vsel %vm452, 1, 0
        %v461 = vsel %vm453, 1, 0
        %v462 = vsel %vm454, 1, 0
        %v463 = vsel %vm455, 1, 0
        %v464 = vsel %vm456, 1, 0
        %v465 = vsel %vm457, 1, 0
        %v466 = vcvt.s32.f32 %v458
        %v467 = vcvt.s32.f32 %v459
        %v468 = vcvt.s32.f32 %v460
        %v469 = vcvt.s32.f32 %v461
        %v470 = vcvt.s32.f32 %v462
        %v471 = vcvt.s32.f32 %v463
        %v472 = vcvt.s32.f32 %v464
        %v473 = vcvt.s32.f32 %v465
        %474 = vset.pattern.permute.xlu0 1
        %475 = vperm.xlu0 %474, %v434
        %v476 = vpop.permute.xlu0 %475
        %477 = vset.pattern.permute.xlu0 1
        %478 = vperm.xlu0 %477, %v435
        %v479 = vpop.permute.xlu0 %478
        %480 = vset.pattern.permute.xlu0 1
        %481 = vperm.xlu0 %480, %v436
        %v482 = vpop.permute.xlu0 %481
        %483 = vset.pattern.permute.xlu0 1
        %484 = vperm.xlu0 %483, %v437
        %v485 = vpop.permute.xlu0 %484
        %vm486 = vcmp.eq.s32.totalorder %v414, %v476
        %vm487 = vcmp.eq.s32.totalorder %v415, %v476
        %vm488 = vcmp.eq.s32.totalorder %v414, %v479
        %vm489 = vcmp.eq.s32.totalorder %v415, %v479
        %vm490 = vcmp.eq.s32.totalorder %v414, %v482
        %vm491 = vcmp.eq.s32.totalorder %v415, %v482
        %vm492 = vcmp.eq.s32.totalorder %v414, %v485
        %vm493 = vcmp.eq.s32.totalorder %v415, %v485
        %v494 = vsel %vm486, 1, 0
        %v495 = vsel %vm487, 1, 0
        %v496 = vsel %vm488, 1, 0
        %v497 = vsel %vm489, 1, 0
        %v498 = vsel %vm490, 1, 0
        %v499 = vsel %vm491, 1, 0
        %v500 = vsel %vm492, 1, 0
        %v501 = vsel %vm493, 1, 0
        %v502 = vcvt.s32.f32 %v494
        %v503 = vcvt.s32.f32 %v495
        %v504 = vcvt.s32.f32 %v496
        %v505 = vcvt.s32.f32 %v497
        %v506 = vcvt.s32.f32 %v498
        %v507 = vcvt.s32.f32 %v499
        %v508 = vcvt.s32.f32 %v500
        %v509 = vcvt.s32.f32 %v501
        %v510 = vadd.f32 %v466, %v502
        %v511 = vadd.f32 %v467, %v503
        %v512 = vadd.f32 %v468, %v504
        %v513 = vadd.f32 %v469, %v505
        %v514 = vadd.f32 %v470, %v506
        %v515 = vadd.f32 %v471, %v507
        %v516 = vadd.f32 %v472, %v508
        %v517 = vadd.f32 %v473, %v509
        %518 = vset.pattern.permute.xlu0 2
        %519 = vperm.xlu0 %518, %v434
        %v520 = vpop.permute.xlu0 %519
        %521 = vset.pattern.permute.xlu0 2
        %522 = vperm.xlu0 %521, %v435
        %v523 = vpop.permute.xlu0 %522
        %524 = vset.pattern.permute.xlu0 2
        %525 = vperm.xlu0 %524, %v436
        %v526 = vpop.permute.xlu0 %525
        %527 = vset.pattern.permute.xlu0 2
        %528 = vperm.xlu0 %527, %v437
        %v529 = vpop.permute.xlu0 %528
        %vm530 = vcmp.eq.s32.totalorder %v414, %v520
        %vm531 = vcmp.eq.s32.totalorder %v415, %v520
        %vm532 = vcmp.eq.s32.totalorder %v414, %v523
        %vm533 = vcmp.eq.s32.totalorder %v415, %v523
        %vm534 = vcmp.eq.s32.totalorder %v414, %v526
        %vm535 = vcmp.eq.s32.totalorder %v415, %v526
        %vm536 = vcmp.eq.s32.totalorder %v414, %v529
        %vm537 = vcmp.eq.s32.totalorder %v415, %v529
        %v538 = vsel %vm530, 1, 0
        %v539 = vsel %vm531, 1, 0
        %v540 = vsel %vm532, 1, 0
        %v541 = vsel %vm533, 1, 0
        %v542 = vsel %vm534, 1, 0
        %v543 = vsel %vm535, 1, 0
        %v544 = vsel %vm536, 1, 0
        %v545 = vsel %vm537, 1, 0
        %v546 = vcvt.s32.f32 %v538
        %v547 = vcvt.s32.f32 %v539
        %v548 = vcvt.s32.f32 %v540
        %v549 = vcvt.s32.f32 %v541
        %v550 = vcvt.s32.f32 %v542
        %v551 = vcvt.s32.f32 %v543
        %v552 = vcvt.s32.f32 %v544
        %v553 = vcvt.s32.f32 %v545
        %v554 = vadd.f32 %v510, %v546
        %v555 = vadd.f32 %v511, %v547
        %v556 = vadd.f32 %v512, %v548
        %v557 = vadd.f32 %v513, %v549
        %v558 = vadd.f32 %v514, %v550
        %v559 = vadd.f32 %v515, %v551
        %v560 = vadd.f32 %v516, %v552
        %v561 = vadd.f32 %v517, %v553
        %562 = vset.pattern.permute.xlu0 3
        %563 = vperm.xlu0 %562, %v434
        %v564 = vpop.permute.xlu0 %563
        %565 = vset.pattern.permute.xlu0 3
        %566 = vperm.xlu0 %565, %v435
        %v567 = vpop.permute.xlu0 %566
        %568 = vset.pattern.permute.xlu0 3
        %569 = vperm.xlu0 %568, %v436
        %v570 = vpop.permute.xlu0 %569
        %571 = vset.pattern.permute.xlu0 3
        %572 = vperm.xlu0 %571, %v437
        %v573 = vpop.permute.xlu0 %572
        %vm574 = vcmp.eq.s32.totalorder %v414, %v564
        %vm575 = vcmp.eq.s32.totalorder %v415, %v564
        %vm576 = vcmp.eq.s32.totalorder %v414, %v567
        %vm577 = vcmp.eq.s32.totalorder %v415, %v567
        %vm578 = vcmp.eq.s32.totalorder %v414, %v570
        %vm579 = vcmp.eq.s32.totalorder %v415, %v570
        %vm580 = vcmp.eq.s32.totalorder %v414, %v573
        %vm581 = vcmp.eq.s32.totalorder %v415, %v573
        %v582 = vsel %vm574, 1, 0
        %v583 = vsel %vm575, 1, 0
        %v584 = vsel %vm576, 1, 0
        %v585 = vsel %vm577, 1, 0
        %v586 = vsel %vm578, 1, 0
        %v587 = vsel %vm579, 1, 0
        %v588 = vsel %vm580, 1, 0
        %v589 = vsel %vm581, 1, 0
        %v590 = vcvt.s32.f32 %v582
        %v591 = vcvt.s32.f32 %v583
        %v592 = vcvt.s32.f32 %v584
        %v593 = vcvt.s32.f32 %v585
        %v594 = vcvt.s32.f32 %v586
        %v595 = vcvt.s32.f32 %v587
        %v596 = vcvt.s32.f32 %v588
        %v597 = vcvt.s32.f32 %v589
        %v598 = vadd.f32 %v554, %v590
        %v599 = vadd.f32 %v555, %v591
        %v600 = vadd.f32 %v556, %v592
        %v601 = vadd.f32 %v557, %v593
        %v602 = vadd.f32 %v558, %v594
        %v603 = vadd.f32 %v559, %v595
        %v604 = vadd.f32 %v560, %v596
        %v605 = vadd.f32 %v561, %v597
        %606 = vset.pattern.permute.xlu0 4
        %607 = vperm.xlu0 %606, %v434
        %v608 = vpop.permute.xlu0 %607
        %609 = vset.pattern.permute.xlu0 4
        %610 = vperm.xlu0 %609, %v435
        %v611 = vpop.permute.xlu0 %610
        %612 = vset.pattern.permute.xlu0 4
        %613 = vperm.xlu0 %612, %v436
        %v614 = vpop.permute.xlu0 %613
        %615 = vset.pattern.permute.xlu0 4
        %616 = vperm.xlu0 %615, %v437
        %v617 = vpop.permute.xlu0 %616
        %vm618 = vcmp.eq.s32.totalorder %v414, %v608
        %vm619 = vcmp.eq.s32.totalorder %v415, %v608
        %vm620 = vcmp.eq.s32.totalorder %v414, %v611
        %vm621 = vcmp.eq.s32.totalorder %v415, %v611
        %vm622 = vcmp.eq.s32.totalorder %v414, %v614
        %vm623 = vcmp.eq.s32.totalorder %v415, %v614
        %vm624 = vcmp.eq.s32.totalorder %v414, %v617
        %vm625 = vcmp.eq.s32.totalorder %v415, %v617
        %v626 = vsel %vm618, 1, 0
        %v627 = vsel %vm619, 1, 0
        %v628 = vsel %vm620, 1, 0
        %v629 = vsel %vm621, 1, 0
        %v630 = vsel %vm622, 1, 0
        %v631 = vsel %vm623, 1, 0
        %v632 = vsel %vm624, 1, 0
        %v633 = vsel %vm625, 1, 0
        %v634 = vcvt.s32.f32 %v626
        %v635 = vcvt.s32.f32 %v627
        %v636 = vcvt.s32.f32 %v628
        %v637 = vcvt.s32.f32 %v629
        %v638 = vcvt.s32.f32 %v630
        %v639 = vcvt.s32.f32 %v631
        %v640 = vcvt.s32.f32 %v632
        %v641 = vcvt.s32.f32 %v633
        %v642 = vadd.f32 %v598, %v634
        %v643 = vadd.f32 %v599, %v635
        %v644 = vadd.f32 %v600, %v636
        %v645 = vadd.f32 %v601, %v637
        %v646 = vadd.f32 %v602, %v638
        %v647 = vadd.f32 %v603, %v639
        %v648 = vadd.f32 %v604, %v640
        %v649 = vadd.f32 %v605, %v641
        %650 = vset.pattern.permute.xlu0 5
        %651 = vperm.xlu0 %650, %v434
        %v652 = vpop.permute.xlu0 %651
        %653 = vset.pattern.permute.xlu0 5
        %654 = vperm.xlu0 %653, %v435
        %v655 = vpop.permute.xlu0 %654
        %656 = vset.pattern.permute.xlu0 5
        %657 = vperm.xlu0 %656, %v436
        %v658 = vpop.permute.xlu0 %657
        %659 = vset.pattern.permute.xlu0 5
        %660 = vperm.xlu0 %659, %v437
        %v661 = vpop.permute.xlu0 %660
        %vm662 = vcmp.eq.s32.totalorder %v414, %v652
        %vm663 = vcmp.eq.s32.totalorder %v415, %v652
        %vm664 = vcmp.eq.s32.totalorder %v414, %v655
        %vm665 = vcmp.eq.s32.totalorder %v415, %v655
        %vm666 = vcmp.eq.s32.totalorder %v414, %v658
        %vm667 = vcmp.eq.s32.totalorder %v415, %v658
        %vm668 = vcmp.eq.s32.totalorder %v414, %v661
        %vm669 = vcmp.eq.s32.totalorder %v415, %v661
        %v670 = vsel %vm662, 1, 0
        %v671 = vsel %vm663, 1, 0
        %v672 = vsel %vm664, 1, 0
        %v673 = vsel %vm665, 1, 0
        %v674 = vsel %vm666, 1, 0
        %v675 = vsel %vm667, 1, 0
        %v676 = vsel %vm668, 1, 0
        %v677 = vsel %vm669, 1, 0
        %v678 = vcvt.s32.f32 %v670
        %v679 = vcvt.s32.f32 %v671
        %v680 = vcvt.s32.f32 %v672
        %v681 = vcvt.s32.f32 %v673
        %v682 = vcvt.s32.f32 %v674
        %v683 = vcvt.s32.f32 %v675
        %v684 = vcvt.s32.f32 %v676
        %v685 = vcvt.s32.f32 %v677
        %v686 = vadd.f32 %v642, %v678
        %v687 = vadd.f32 %v643, %v679
        %v688 = vadd.f32 %v644, %v680
        %v689 = vadd.f32 %v645, %v681
        %v690 = vadd.f32 %v646, %v682
        %v691 = vadd.f32 %v647, %v683
        %v692 = vadd.f32 %v648, %v684
        %v693 = vadd.f32 %v649, %v685
        %694 = vset.pattern.permute.xlu0 6
        %695 = vperm.xlu0 %694, %v434
        %v696 = vpop.permute.xlu0 %695
        %697 = vset.pattern.permute.xlu0 6
        %698 = vperm.xlu0 %697, %v435
        %v699 = vpop.permute.xlu0 %698
        %700 = vset.pattern.permute.xlu0 6
        %701 = vperm.xlu0 %700, %v436
        %v702 = vpop.permute.xlu0 %701
        %703 = vset.pattern.permute.xlu0 6
        %704 = vperm.xlu0 %703, %v437
        %v705 = vpop.permute.xlu0 %704
        %vm706 = vcmp.eq.s32.totalorder %v414, %v696
        %vm707 = vcmp.eq.s32.totalorder %v415, %v696
        %vm708 = vcmp.eq.s32.totalorder %v414, %v699
        %vm709 = vcmp.eq.s32.totalorder %v415, %v699
        %vm710 = vcmp.eq.s32.totalorder %v414, %v702
        %vm711 = vcmp.eq.s32.totalorder %v415, %v702
        %vm712 = vcmp.eq.s32.totalorder %v414, %v705
        %vm713 = vcmp.eq.s32.totalorder %v415, %v705
        %v714 = vsel %vm706, 1, 0
        %v715 = vsel %vm707, 1, 0
        %v716 = vsel %vm708, 1, 0
        %v717 = vsel %vm709, 1, 0
        %v718 = vsel %vm710, 1, 0
        %v719 = vsel %vm711, 1, 0
        %v720 = vsel %vm712, 1, 0
        %v721 = vsel %vm713, 1, 0
        %v722 = vcvt.s32.f32 %v714
        %v723 = vcvt.s32.f32 %v715
        %v724 = vcvt.s32.f32 %v716
        %v725 = vcvt.s32.f32 %v717
        %v726 = vcvt.s32.f32 %v718
        %v727 = vcvt.s32.f32 %v719
        %v728 = vcvt.s32.f32 %v720
        %v729 = vcvt.s32.f32 %v721
        %v730 = vadd.f32 %v686, %v722
        %v731 = vadd.f32 %v687, %v723
        %v732 = vadd.f32 %v688, %v724
        %v733 = vadd.f32 %v689, %v725
        %v734 = vadd.f32 %v690, %v726
        %v735 = vadd.f32 %v691, %v727
        %v736 = vadd.f32 %v692, %v728
        %v737 = vadd.f32 %v693, %v729
        %738 = vset.pattern.permute.xlu0 7
        %739 = vperm.xlu0 %738, %v434
        %v740 = vpop.permute.xlu0 %739
        %741 = vset.pattern.permute.xlu0 7
        %742 = vperm.xlu0 %741, %v435
        %v743 = vpop.permute.xlu0 %742
        %744 = vset.pattern.permute.xlu0 7
        %745 = vperm.xlu0 %744, %v436
        %v746 = vpop.permute.xlu0 %745
        %747 = vset.pattern.permute.xlu0 7
        %748 = vperm.xlu0 %747, %v437
        %v749 = vpop.permute.xlu0 %748
        %vm750 = vcmp.eq.s32.totalorder %v414, %v740
        %vm751 = vcmp.eq.s32.totalorder %v415, %v740
        %vm752 = vcmp.eq.s32.totalorder %v414, %v743
        %vm753 = vcmp.eq.s32.totalorder %v415, %v743
        %vm754 = vcmp.eq.s32.totalorder %v414, %v746
        %vm755 = vcmp.eq.s32.totalorder %v415, %v746
        %vm756 = vcmp.eq.s32.totalorder %v414, %v749
        %vm757 = vcmp.eq.s32.totalorder %v415, %v749
        %v758 = vsel %vm750, 1, 0
        %v759 = vsel %vm751, 1, 0
        %v760 = vsel %vm752, 1, 0
        %v761 = vsel %vm753, 1, 0
        %v762 = vsel %vm754, 1, 0
        %v763 = vsel %vm755, 1, 0
        %v764 = vsel %vm756, 1, 0
        %v765 = vsel %vm757, 1, 0
        %v766 = vcvt.s32.f32 %v758
        %v767 = vcvt.s32.f32 %v759
        %v768 = vcvt.s32.f32 %v760
        %v769 = vcvt.s32.f32 %v761
        %v770 = vcvt.s32.f32 %v762
        %v771 = vcvt.s32.f32 %v763
        %v772 = vcvt.s32.f32 %v764
        %v773 = vcvt.s32.f32 %v765
        %v774 = vadd.f32 %v730, %v766
        %v775 = vadd.f32 %v731, %v767
        %v776 = vadd.f32 %v732, %v768
        %v777 = vadd.f32 %v733, %v769
        %v778 = vadd.f32 %v734, %v770
        %v779 = vadd.f32 %v735, %v771
        %v780 = vadd.f32 %v736, %v772
        %v781 = vadd.f32 %v737, %v773
        %v782 = vmul.f32 %v416, %v774
        %v783 = vmul.f32 %v417, %v775
        %v784 = vmul.f32 %v418, %v776
        %v785 = vmul.f32 %v419, %v777
        %v786 = vmul.f32 %v420, %v778
        %v787 = vmul.f32 %v421, %v779
        %v788 = vmul.f32 %v422, %v780
        %v789 = vmul.f32 %v423, %v781
        %v790 = vadd.f32 %v782, %v783
        %791 = vadd.xlane.f32.xlu0 %v790
        %v792 = vpop.xlane.xlu0 %791
        %v793 = vadd.f32 %v784, %v785
        %794 = vadd.xlane.f32.xlu0 %v793
        %v795 = vpop.xlane.xlu0 %794
        %v796 = vadd.f32 %v786, %v787
        %797 = vadd.xlane.f32.xlu0 %v796
        %v798 = vpop.xlane.xlu0 %797
        %v799 = vadd.f32 %v788, %v789
        %800 = vadd.xlane.f32.xlu0 %v799
        %v801 = vpop.xlane.xlu0 %800
        %v802 = vadd.f32 %v792, 0.0
        %v803 = vadd.f32 %v795, 0.0
        %v804 = vadd.f32 %v798, 0.0
        %v805 = vadd.f32 %v801, 0.0
        %v806 = vsub.s32 %v409, %v433
        %v807 = vsub.s32 %v410, %v433
        %v808 = vsub.s32 %v411, %v433
        %v809 = vsub.s32 %v412, %v433
        %810 = vset.pattern.permute.xlu0 0
        %811 = vperm.xlu0 %810, %v806
        %v812 = vpop.permute.xlu0 %811
        %813 = vset.pattern.permute.xlu0 0
        %814 = vperm.xlu0 %813, %v807
        %v815 = vpop.permute.xlu0 %814
        %816 = vset.pattern.permute.xlu0 0
        %817 = vperm.xlu0 %816, %v808
        %v818 = vpop.permute.xlu0 %817
        %819 = vset.pattern.permute.xlu0 0
        %820 = vperm.xlu0 %819, %v809
        %v821 = vpop.permute.xlu0 %820
        %vm822 = vcmp.eq.s32.totalorder %v414, %v812
        %vm823 = vcmp.eq.s32.totalorder %v415, %v812
        %vm824 = vcmp.eq.s32.totalorder %v414, %v815
        %vm825 = vcmp.eq.s32.totalorder %v415, %v815
        %vm826 = vcmp.eq.s32.totalorder %v414, %v818
        %vm827 = vcmp.eq.s32.totalorder %v415, %v818
        %vm828 = vcmp.eq.s32.totalorder %v414, %v821
        %vm829 = vcmp.eq.s32.totalorder %v415, %v821
        %v830 = vsel %vm822, %v424, 0.0
        %v831 = vsel %vm823, %v425, 0.0
        %v832 = vsel %vm824, %v426, 0.0
        %v833 = vsel %vm825, %v427, 0.0
        %v834 = vsel %vm826, %v428, 0.0
        %v835 = vsel %vm827, %v429, 0.0
        %v836 = vsel %vm828, %v430, 0.0
        %v837 = vsel %vm829, %v431, 0.0
        %v838 = vadd.f32 %v830, %v831
        %839 = vadd.xlane.f32.xlu0 %v838
        %v840 = vpop.xlane.xlu0 %839
        %v841 = vadd.f32 %v832, %v833
        %842 = vadd.xlane.f32.xlu0 %v841
        %v843 = vpop.xlane.xlu0 %842
        %v844 = vadd.f32 %v834, %v835
        %845 = vadd.xlane.f32.xlu0 %v844
        %v846 = vpop.xlane.xlu0 %845
        %v847 = vadd.f32 %v836, %v837
        %848 = vadd.xlane.f32.xlu0 %v847
        %v849 = vpop.xlane.xlu0 %848
        %vm850 = vcmp.eq.s32.totalorder %v414, 0
        %v851 = vsel %vm850, 1, 0
        %vm852 = vcmp.eq.s32.totalorder %v851, 1
        %v853 = vsel %vm852, %v840, 0.0
        %v854 = vsel %vm852, %v843, 0.0
        %v855 = vsel %vm852, %v846, 0.0
        %v856 = vsel %vm852, %v849, 0.0
        %v857 = vadd.f32 %v853, 0.0
        %v858 = vadd.f32 %v854, 0.0
        %v859 = vadd.f32 %v855, 0.0
        %v860 = vadd.f32 %v856, 0.0
        %861 = vset.pattern.permute.xlu0 1
        %862 = vperm.xlu0 %861, %v806
        %v863 = vpop.permute.xlu0 %862
        %864 = vset.pattern.permute.xlu0 1
        %865 = vperm.xlu0 %864, %v807
        %v866 = vpop.permute.xlu0 %865
        %867 = vset.pattern.permute.xlu0 1
        %868 = vperm.xlu0 %867, %v808
        %v869 = vpop.permute.xlu0 %868
        %870 = vset.pattern.permute.xlu0 1
        %871 = vperm.xlu0 %870, %v809
        %v872 = vpop.permute.xlu0 %871
        %vm873 = vcmp.eq.s32.totalorder %v414, %v863
        %vm874 = vcmp.eq.s32.totalorder %v415, %v863
        %vm875 = vcmp.eq.s32.totalorder %v414, %v866
        %vm876 = vcmp.eq.s32.totalorder %v415, %v866
        %vm877 = vcmp.eq.s32.totalorder %v414, %v869
        %vm878 = vcmp.eq.s32.totalorder %v415, %v869
        %vm879 = vcmp.eq.s32.totalorder %v414, %v872
        %vm880 = vcmp.eq.s32.totalorder %v415, %v872
        %v881 = vsel %vm873, %v424, 0.0
        %v882 = vsel %vm874, %v425, 0.0
        %v883 = vsel %vm875, %v426, 0.0
        %v884 = vsel %vm876, %v427, 0.0
        %v885 = vsel %vm877, %v428, 0.0
        %v886 = vsel %vm878, %v429, 0.0
        %v887 = vsel %vm879, %v430, 0.0
        %v888 = vsel %vm880, %v431, 0.0
        %v889 = vadd.f32 %v881, %v882
        %890 = vadd.xlane.f32.xlu0 %v889
        %v891 = vpop.xlane.xlu0 %890
        %v892 = vadd.f32 %v883, %v884
        %893 = vadd.xlane.f32.xlu0 %v892
        %v894 = vpop.xlane.xlu0 %893
        %v895 = vadd.f32 %v885, %v886
        %896 = vadd.xlane.f32.xlu0 %v895
        %v897 = vpop.xlane.xlu0 %896
        %v898 = vadd.f32 %v887, %v888
        %899 = vadd.xlane.f32.xlu0 %v898
        %v900 = vpop.xlane.xlu0 %899
        %vm901 = vcmp.eq.s32.totalorder %v414, 1
        %v902 = vsel %vm901, 1, 0
        %vm903 = vcmp.eq.s32.totalorder %v902, 1
        %v904 = vsel %vm903, %v891, 0.0
        %v905 = vsel %vm903, %v894, 0.0
        %v906 = vsel %vm903, %v897, 0.0
        %v907 = vsel %vm903, %v900, 0.0
        %v908 = vadd.f32 %v857, %v904
        %v909 = vadd.f32 %v858, %v905
        %v910 = vadd.f32 %v859, %v906
        %v911 = vadd.f32 %v860, %v907
        %912 = vset.pattern.permute.xlu0 2
        %913 = vperm.xlu0 %912, %v806
        %v914 = vpop.permute.xlu0 %913
        %915 = vset.pattern.permute.xlu0 2
        %916 = vperm.xlu0 %915, %v807
        %v917 = vpop.permute.xlu0 %916
        %918 = vset.pattern.permute.xlu0 2
        %919 = vperm.xlu0 %918, %v808
        %v920 = vpop.permute.xlu0 %919
        %921 = vset.pattern.permute.xlu0 2
        %922 = vperm.xlu0 %921, %v809
        %v923 = vpop.permute.xlu0 %922
        %vm924 = vcmp.eq.s32.totalorder %v414, %v914
        %vm925 = vcmp.eq.s32.totalorder %v415, %v914
        %vm926 = vcmp.eq.s32.totalorder %v414, %v917
        %vm927 = vcmp.eq.s32.totalorder %v415, %v917
        %vm928 = vcmp.eq.s32.totalorder %v414, %v920
        %vm929 = vcmp.eq.s32.totalorder %v415, %v920
        %vm930 = vcmp.eq.s32.totalorder %v414, %v923
        %vm931 = vcmp.eq.s32.totalorder %v415, %v923
        %v932 = vsel %vm924, %v424, 0.0
        %v933 = vsel %vm925, %v425, 0.0
        %v934 = vsel %vm926, %v426, 0.0
        %v935 = vsel %vm927, %v427, 0.0
        %v936 = vsel %vm928, %v428, 0.0
        %v937 = vsel %vm929, %v429, 0.0
        %v938 = vsel %vm930, %v430, 0.0
        %v939 = vsel %vm931, %v431, 0.0
        %v940 = vadd.f32 %v932, %v933
        %941 = vadd.xlane.f32.xlu0 %v940
        %v942 = vpop.xlane.xlu0 %941
        %v943 = vadd.f32 %v934, %v935
        %944 = vadd.xlane.f32.xlu0 %v943
        %v945 = vpop.xlane.xlu0 %944
        %v946 = vadd.f32 %v936, %v937
        %947 = vadd.xlane.f32.xlu0 %v946
        %v948 = vpop.xlane.xlu0 %947
        %v949 = vadd.f32 %v938, %v939
        %950 = vadd.xlane.f32.xlu0 %v949
        %v951 = vpop.xlane.xlu0 %950
        %vm952 = vcmp.eq.s32.totalorder %v414, 2
        %v953 = vsel %vm952, 1, 0
        %vm954 = vcmp.eq.s32.totalorder %v953, 1
        %v955 = vsel %vm954, %v942, 0.0
        %v956 = vsel %vm954, %v945, 0.0
        %v957 = vsel %vm954, %v948, 0.0
        %v958 = vsel %vm954, %v951, 0.0
        %v959 = vadd.f32 %v908, %v955
        %v960 = vadd.f32 %v909, %v956
        %v961 = vadd.f32 %v910, %v957
        %v962 = vadd.f32 %v911, %v958
        %963 = vset.pattern.permute.xlu0 3
        %964 = vperm.xlu0 %963, %v806
        %v965 = vpop.permute.xlu0 %964
        %966 = vset.pattern.permute.xlu0 3
        %967 = vperm.xlu0 %966, %v807
        %v968 = vpop.permute.xlu0 %967
        %969 = vset.pattern.permute.xlu0 3
        %970 = vperm.xlu0 %969, %v808
        %v971 = vpop.permute.xlu0 %970
        %972 = vset.pattern.permute.xlu0 3
        %973 = vperm.xlu0 %972, %v809
        %v974 = vpop.permute.xlu0 %973
        %vm975 = vcmp.eq.s32.totalorder %v414, %v965
        %vm976 = vcmp.eq.s32.totalorder %v415, %v965
        %vm977 = vcmp.eq.s32.totalorder %v414, %v968
        %vm978 = vcmp.eq.s32.totalorder %v415, %v968
        %vm979 = vcmp.eq.s32.totalorder %v414, %v971
        %vm980 = vcmp.eq.s32.totalorder %v415, %v971
        %vm981 = vcmp.eq.s32.totalorder %v414, %v974
        %vm982 = vcmp.eq.s32.totalorder %v415, %v974
        %v983 = vsel %vm975, %v424, 0.0
        %v984 = vsel %vm976, %v425, 0.0
        %v985 = vsel %vm977, %v426, 0.0
        %v986 = vsel %vm978, %v427, 0.0
        %v987 = vsel %vm979, %v428, 0.0
        %v988 = vsel %vm980, %v429, 0.0
        %v989 = vsel %vm981, %v430, 0.0
        %v990 = vsel %vm982, %v431, 0.0
        %v991 = vadd.f32 %v983, %v984
        %992 = vadd.xlane.f32.xlu0 %v991
        %v993 = vpop.xlane.xlu0 %992
        %v994 = vadd.f32 %v985, %v986
        %995 = vadd.xlane.f32.xlu0 %v994
        %v996 = vpop.xlane.xlu0 %995
        %v997 = vadd.f32 %v987, %v988
        %998 = vadd.xlane.f32.xlu0 %v997
        %v999 = vpop.xlane.xlu0 %998
        %v1000 = vadd.f32 %v989, %v990
        %1001 = vadd.xlane.f32.xlu0 %v1000
        %v1002 = vpop.xlane.xlu0 %1001
        %vm1003 = vcmp.eq.s32.totalorder %v414, 3
        %v1004 = vsel %vm1003, 1, 0
        %vm1005 = vcmp.eq.s32.totalorder %v1004, 1
        %v1006 = vsel %vm1005, %v993, 0.0
        %v1007 = vsel %vm1005, %v996, 0.0
        %v1008 = vsel %vm1005, %v999, 0.0
        %v1009 = vsel %vm1005, %v1002, 0.0
        %v1010 = vadd.f32 %v959, %v1006
        %v1011 = vadd.f32 %v960, %v1007
        %v1012 = vadd.f32 %v961, %v1008
        %v1013 = vadd.f32 %v962, %v1009
        %1014 = vset.pattern.permute.xlu0 4
        %1015 = vperm.xlu0 %1014, %v806
        %v1016 = vpop.permute.xlu0 %1015
        %1017 = vset.pattern.permute.xlu0 4
        %1018 = vperm.xlu0 %1017, %v807
        %v1019 = vpop.permute.xlu0 %1018
        %1020 = vset.pattern.permute.xlu0 4
        %1021 = vperm.xlu0 %1020, %v808
        %v1022 = vpop.permute.xlu0 %1021
        %1023 = vset.pattern.permute.xlu0 4
        %1024 = vperm.xlu0 %1023, %v809
        %v1025 = vpop.permute.xlu0 %1024
        %vm1026 = vcmp.eq.s32.totalorder %v414, %v1016
        %vm1027 = vcmp.eq.s32.totalorder %v415, %v1016
        %vm1028 = vcmp.eq.s32.totalorder %v414, %v1019
        %vm1029 = vcmp.eq.s32.totalorder %v415, %v1019
        %vm1030 = vcmp.eq.s32.totalorder %v414, %v1022
        %vm1031 = vcmp.eq.s32.totalorder %v415, %v1022
        %vm1032 = vcmp.eq.s32.totalorder %v414, %v1025
        %vm1033 = vcmp.eq.s32.totalorder %v415, %v1025
        %v1034 = vsel %vm1026, %v424, 0.0
        %v1035 = vsel %vm1027, %v425, 0.0
        %v1036 = vsel %vm1028, %v426, 0.0
        %v1037 = vsel %vm1029, %v427, 0.0
        %v1038 = vsel %vm1030, %v428, 0.0
        %v1039 = vsel %vm1031, %v429, 0.0
        %v1040 = vsel %vm1032, %v430, 0.0
        %v1041 = vsel %vm1033, %v431, 0.0
        %v1042 = vadd.f32 %v1034, %v1035
        %1043 = vadd.xlane.f32.xlu0 %v1042
        %v1044 = vpop.xlane.xlu0 %1043
        %v1045 = vadd.f32 %v1036, %v1037
        %1046 = vadd.xlane.f32.xlu0 %v1045
        %v1047 = vpop.xlane.xlu0 %1046
        %v1048 = vadd.f32 %v1038, %v1039
        %1049 = vadd.xlane.f32.xlu0 %v1048
        %v1050 = vpop.xlane.xlu0 %1049
        %v1051 = vadd.f32 %v1040, %v1041
        %1052 = vadd.xlane.f32.xlu0 %v1051
        %v1053 = vpop.xlane.xlu0 %1052
        %vm1054 = vcmp.eq.s32.totalorder %v414, 4
        %v1055 = vsel %vm1054, 1, 0
        %vm1056 = vcmp.eq.s32.totalorder %v1055, 1
        %v1057 = vsel %vm1056, %v1044, 0.0
        %v1058 = vsel %vm1056, %v1047, 0.0
        %v1059 = vsel %vm1056, %v1050, 0.0
        %v1060 = vsel %vm1056, %v1053, 0.0
        %v1061 = vadd.f32 %v1010, %v1057
        %v1062 = vadd.f32 %v1011, %v1058
        %v1063 = vadd.f32 %v1012, %v1059
        %v1064 = vadd.f32 %v1013, %v1060
        %1065 = vset.pattern.permute.xlu0 5
        %1066 = vperm.xlu0 %1065, %v806
        %v1067 = vpop.permute.xlu0 %1066
        %1068 = vset.pattern.permute.xlu0 5
        %1069 = vperm.xlu0 %1068, %v807
        %v1070 = vpop.permute.xlu0 %1069
        %1071 = vset.pattern.permute.xlu0 5
        %1072 = vperm.xlu0 %1071, %v808
        %v1073 = vpop.permute.xlu0 %1072
        %1074 = vset.pattern.permute.xlu0 5
        %1075 = vperm.xlu0 %1074, %v809
        %v1076 = vpop.permute.xlu0 %1075
        %vm1077 = vcmp.eq.s32.totalorder %v414, %v1067
        %vm1078 = vcmp.eq.s32.totalorder %v415, %v1067
        %vm1079 = vcmp.eq.s32.totalorder %v414, %v1070
        %vm1080 = vcmp.eq.s32.totalorder %v415, %v1070
        %vm1081 = vcmp.eq.s32.totalorder %v414, %v1073
        %vm1082 = vcmp.eq.s32.totalorder %v415, %v1073
        %vm1083 = vcmp.eq.s32.totalorder %v414, %v1076
        %vm1084 = vcmp.eq.s32.totalorder %v415, %v1076
        %v1085 = vsel %vm1077, %v424, 0.0
        %v1086 = vsel %vm1078, %v425, 0.0
        %v1087 = vsel %vm1079, %v426, 0.0
        %v1088 = vsel %vm1080, %v427, 0.0
        %v1089 = vsel %vm1081, %v428, 0.0
        %v1090 = vsel %vm1082, %v429, 0.0
        %v1091 = vsel %vm1083, %v430, 0.0
        %v1092 = vsel %vm1084, %v431, 0.0
        %v1093 = vadd.f32 %v1085, %v1086
        %1094 = vadd.xlane.f32.xlu0 %v1093
        %v1095 = vpop.xlane.xlu0 %1094
        %v1096 = vadd.f32 %v1087, %v1088
        %1097 = vadd.xlane.f32.xlu0 %v1096
        %v1098 = vpop.xlane.xlu0 %1097
        %v1099 = vadd.f32 %v1089, %v1090
        %1100 = vadd.xlane.f32.xlu0 %v1099
        %v1101 = vpop.xlane.xlu0 %1100
        %v1102 = vadd.f32 %v1091, %v1092
        %1103 = vadd.xlane.f32.xlu0 %v1102
        %v1104 = vpop.xlane.xlu0 %1103
        %vm1105 = vcmp.eq.s32.totalorder %v414, 5
        %v1106 = vsel %vm1105, 1, 0
        %vm1107 = vcmp.eq.s32.totalorder %v1106, 1
        %v1108 = vsel %vm1107, %v1095, 0.0
        %v1109 = vsel %vm1107, %v1098, 0.0
        %v1110 = vsel %vm1107, %v1101, 0.0
        %v1111 = vsel %vm1107, %v1104, 0.0
        %v1112 = vadd.f32 %v1061, %v1108
        %v1113 = vadd.f32 %v1062, %v1109
        %v1114 = vadd.f32 %v1063, %v1110
        %v1115 = vadd.f32 %v1064, %v1111
        %1116 = vset.pattern.permute.xlu0 6
        %1117 = vperm.xlu0 %1116, %v806
        %v1118 = vpop.permute.xlu0 %1117
        %1119 = vset.pattern.permute.xlu0 6
        %1120 = vperm.xlu0 %1119, %v807
        %v1121 = vpop.permute.xlu0 %1120
        %1122 = vset.pattern.permute.xlu0 6
        %1123 = vperm.xlu0 %1122, %v808
        %v1124 = vpop.permute.xlu0 %1123
        %1125 = vset.pattern.permute.xlu0 6
        %1126 = vperm.xlu0 %1125, %v809
        %v1127 = vpop.permute.xlu0 %1126
        %vm1128 = vcmp.eq.s32.totalorder %v414, %v1118
        %vm1129 = vcmp.eq.s32.totalorder %v415, %v1118
        %vm1130 = vcmp.eq.s32.totalorder %v414, %v1121
        %vm1131 = vcmp.eq.s32.totalorder %v415, %v1121
        %vm1132 = vcmp.eq.s32.totalorder %v414, %v1124
        %vm1133 = vcmp.eq.s32.totalorder %v415, %v1124
        %vm1134 = vcmp.eq.s32.totalorder %v414, %v1127
        %vm1135 = vcmp.eq.s32.totalorder %v415, %v1127
        %v1136 = vsel %vm1128, %v424, 0.0
        %v1137 = vsel %vm1129, %v425, 0.0
        %v1138 = vsel %vm1130, %v426, 0.0
        %v1139 = vsel %vm1131, %v427, 0.0
        %v1140 = vsel %vm1132, %v428, 0.0
        %v1141 = vsel %vm1133, %v429, 0.0
        %v1142 = vsel %vm1134, %v430, 0.0
        %v1143 = vsel %vm1135, %v431, 0.0
        %v1144 = vadd.f32 %v1136, %v1137
        %1145 = vadd.xlane.f32.xlu0 %v1144
        %v1146 = vpop.xlane.xlu0 %1145
        %v1147 = vadd.f32 %v1138, %v1139
        %1148 = vadd.xlane.f32.xlu0 %v1147
        %v1149 = vpop.xlane.xlu0 %1148
        %v1150 = vadd.f32 %v1140, %v1141
        %1151 = vadd.xlane.f32.xlu0 %v1150
        %v1152 = vpop.xlane.xlu0 %1151
        %v1153 = vadd.f32 %v1142, %v1143
        %1154 = vadd.xlane.f32.xlu0 %v1153
        %v1155 = vpop.xlane.xlu0 %1154
        %vm1156 = vcmp.eq.s32.totalorder %v414, 6
        %v1157 = vsel %vm1156, 1, 0
        %vm1158 = vcmp.eq.s32.totalorder %v1157, 1
        %v1159 = vsel %vm1158, %v1146, 0.0
        %v1160 = vsel %vm1158, %v1149, 0.0
        %v1161 = vsel %vm1158, %v1152, 0.0
        %v1162 = vsel %vm1158, %v1155, 0.0
        %v1163 = vadd.f32 %v1112, %v1159
        %v1164 = vadd.f32 %v1113, %v1160
        %v1165 = vadd.f32 %v1114, %v1161
        %v1166 = vadd.f32 %v1115, %v1162
        %1167 = vset.pattern.permute.xlu0 7
        %1168 = vperm.xlu0 %1167, %v806
        %v1169 = vpop.permute.xlu0 %1168
        %1170 = vset.pattern.permute.xlu0 7
        %1171 = vperm.xlu0 %1170, %v807
        %v1172 = vpop.permute.xlu0 %1171
        %1173 = vset.pattern.permute.xlu0 7
        %1174 = vperm.xlu0 %1173, %v808
        %v1175 = vpop.permute.xlu0 %1174
        %1176 = vset.pattern.permute.xlu0 7
        %1177 = vperm.xlu0 %1176, %v809
        %v1178 = vpop.permute.xlu0 %1177
        %vm1179 = vcmp.eq.s32.totalorder %v414, %v1169
        %vm1180 = vcmp.eq.s32.totalorder %v415, %v1169
        %vm1181 = vcmp.eq.s32.totalorder %v414, %v1172
        %vm1182 = vcmp.eq.s32.totalorder %v415, %v1172
        %vm1183 = vcmp.eq.s32.totalorder %v414, %v1175
        %vm1184 = vcmp.eq.s32.totalorder %v415, %v1175
        %vm1185 = vcmp.eq.s32.totalorder %v414, %v1178
        %vm1186 = vcmp.eq.s32.totalorder %v415, %v1178
        %v1187 = vsel %vm1179, %v424, 0.0
        %v1188 = vsel %vm1180, %v425, 0.0
        %v1189 = vsel %vm1181, %v426, 0.0
        %v1190 = vsel %vm1182, %v427, 0.0
        %v1191 = vsel %vm1183, %v428, 0.0
        %v1192 = vsel %vm1184, %v429, 0.0
        %v1193 = vsel %vm1185, %v430, 0.0
        %v1194 = vsel %vm1186, %v431, 0.0
        %v1195 = vadd.f32 %v1187, %v1188
        %1196 = vadd.xlane.f32.xlu0 %v1195
        %v1197 = vpop.xlane.xlu0 %1196
        %v1198 = vadd.f32 %v1189, %v1190
        %1199 = vadd.xlane.f32.xlu0 %v1198
        %v1200 = vpop.xlane.xlu0 %1199
        %v1201 = vadd.f32 %v1191, %v1192
        %1202 = vadd.xlane.f32.xlu0 %v1201
        %v1203 = vpop.xlane.xlu0 %1202
        %v1204 = vadd.f32 %v1193, %v1194
        %1205 = vadd.xlane.f32.xlu0 %v1204
        %v1206 = vpop.xlane.xlu0 %1205
        %vm1207 = vcmp.eq.s32.totalorder %v414, 7
        %v1208 = vsel %vm1207, 1, 0
        %vm1209 = vcmp.eq.s32.totalorder %v1208, 1
        %v1210 = vsel %vm1209, %v1197, 0.0
        %v1211 = vsel %vm1209, %v1200, 0.0
        %v1212 = vsel %vm1209, %v1203, 0.0
        %v1213 = vsel %vm1209, %v1206, 0.0
        %v1214 = vadd.f32 %v1163, %v1210
        %v1215 = vadd.f32 %v1164, %v1211
        %v1216 = vadd.f32 %v1165, %v1212
        %v1217 = vadd.f32 %v1166, %v1213
        %s1218 = scalar_lea.vmem %s331, 16 [#allocation2]
        %v1219 = vld [vmem:[%s1218] sm:$0xff]
        %v1220 = vld [vmem:[%s1218 + $0x8] sm:$0xff]
        %v1221 = vld [vmem:[%s1218 + $0x20] sm:$0xff]
        %v1222 = vld [vmem:[%s1218 + $0x28] sm:$0xff]
        %v1223 = vld [vmem:[%s1218 + $0x40] sm:$0xff]
        %v1224 = vld [vmem:[%s1218 + $0x48] sm:$0xff]
        %v1225 = vld [vmem:[%s1218 + $0x60] sm:$0xff]
        %v1226 = vld [vmem:[%s1218 + $0x68] sm:$0xff]
        %s1227 = scalar_lea.vmem %s338, 16 [#allocation3]
        %v1228 = vld [vmem:[%s1227] sm:$0xff]
        %v1229 = vld [vmem:[%s1227 + $0x8] sm:$0xff]
        %v1230 = vld [vmem:[%s1227 + $0x20] sm:$0xff]
        %v1231 = vld [vmem:[%s1227 + $0x28] sm:$0xff]
        %v1232 = vld [vmem:[%s1227 + $0x40] sm:$0xff]
        %v1233 = vld [vmem:[%s1227 + $0x48] sm:$0xff]
        %v1234 = vld [vmem:[%s1227 + $0x60] sm:$0xff]
        %v1235 = vld [vmem:[%s1227 + $0x68] sm:$0xff]
        %s1236 = sadd.s32 %s404, 256
        %v1237 = vstv %s1236
        %v1238 = vsub.s32 %v405, %v1237
        %v1239 = vsub.s32 %v406, %v1237
        %v1240 = vsub.s32 %v407, %v1237
        %v1241 = vsub.s32 %v408, %v1237
        %1242 = vset.pattern.permute.xlu0 0
        %1243 = vperm.xlu0 %1242, %v1238
        %v1244 = vpop.permute.xlu0 %1243
        %1245 = vset.pattern.permute.xlu0 0
        %1246 = vperm.xlu0 %1245, %v1239
        %v1247 = vpop.permute.xlu0 %1246
        %1248 = vset.pattern.permute.xlu0 0
        %1249 = vperm.xlu0 %1248, %v1240
        %v1250 = vpop.permute.xlu0 %1249
        %1251 = vset.pattern.permute.xlu0 0
        %1252 = vperm.xlu0 %1251, %v1241
        %v1253 = vpop.permute.xlu0 %1252
        %vm1254 = vcmp.eq.s32.totalorder %v414, %v1244
        %vm1255 = vcmp.eq.s32.totalorder %v415, %v1244
        %vm1256 = vcmp.eq.s32.totalorder %v414, %v1247
        %vm1257 = vcmp.eq.s32.totalorder %v415, %v1247
        %vm1258 = vcmp.eq.s32.totalorder %v414, %v1250
        %vm1259 = vcmp.eq.s32.totalorder %v415, %v1250
        %vm1260 = vcmp.eq.s32.totalorder %v414, %v1253
        %vm1261 = vcmp.eq.s32.totalorder %v415, %v1253
        %v1262 = vsel %vm1254, 1, 0
        %v1263 = vsel %vm1255, 1, 0
        %v1264 = vsel %vm1256, 1, 0
        %v1265 = vsel %vm1257, 1, 0
        %v1266 = vsel %vm1258, 1, 0
        %v1267 = vsel %vm1259, 1, 0
        %v1268 = vsel %vm1260, 1, 0
        %v1269 = vsel %vm1261, 1, 0
        %v1270 = vcvt.s32.f32 %v1262
        %v1271 = vcvt.s32.f32 %v1263
        %v1272 = vcvt.s32.f32 %v1264
        %v1273 = vcvt.s32.f32 %v1265
        %v1274 = vcvt.s32.f32 %v1266
        %v1275 = vcvt.s32.f32 %v1267
        %v1276 = vcvt.s32.f32 %v1268
        %v1277 = vcvt.s32.f32 %v1269
        %1278 = vset.pattern.permute.xlu0 1
        %1279 = vperm.xlu0 %1278, %v1238
        %v1280 = vpop.permute.xlu0 %1279
        %1281 = vset.pattern.permute.xlu0 1
        %1282 = vperm.xlu0 %1281, %v1239
        %v1283 = vpop.permute.xlu0 %1282
        %1284 = vset.pattern.permute.xlu0 1
        %1285 = vperm.xlu0 %1284, %v1240
        %v1286 = vpop.permute.xlu0 %1285
        %1287 = vset.pattern.permute.xlu0 1
        %1288 = vperm.xlu0 %1287, %v1241
        %v1289 = vpop.permute.xlu0 %1288
        %vm1290 = vcmp.eq.s32.totalorder %v414, %v1280
        %vm1291 = vcmp.eq.s32.totalorder %v415, %v1280
        %vm1292 = vcmp.eq.s32.totalorder %v414, %v1283
        %vm1293 = vcmp.eq.s32.totalorder %v415, %v1283
        %vm1294 = vcmp.eq.s32.totalorder %v414, %v1286
        %vm1295 = vcmp.eq.s32.totalorder %v415, %v1286
        %vm1296 = vcmp.eq.s32.totalorder %v414, %v1289
        %vm1297 = vcmp.eq.s32.totalorder %v415, %v1289
        %v1298 = vsel %vm1290, 1, 0
        %v1299 = vsel %vm1291, 1, 0
        %v1300 = vsel %vm1292, 1, 0
        %v1301 = vsel %vm1293, 1, 0
        %v1302 = vsel %vm1294, 1, 0
        %v1303 = vsel %vm1295, 1, 0
        %v1304 = vsel %vm1296, 1, 0
        %v1305 = vsel %vm1297, 1, 0
        %v1306 = vcvt.s32.f32 %v1298
        %v1307 = vcvt.s32.f32 %v1299
        %v1308 = vcvt.s32.f32 %v1300
        %v1309 = vcvt.s32.f32 %v1301
        %v1310 = vcvt.s32.f32 %v1302
        %v1311 = vcvt.s32.f32 %v1303
        %v1312 = vcvt.s32.f32 %v1304
        %v1313 = vcvt.s32.f32 %v1305
        %v1314 = vadd.f32 %v1270, %v1306
        %v1315 = vadd.f32 %v1271, %v1307
        %v1316 = vadd.f32 %v1272, %v1308
        %v1317 = vadd.f32 %v1273, %v1309
        %v1318 = vadd.f32 %v1274, %v1310
        %v1319 = vadd.f32 %v1275, %v1311
        %v1320 = vadd.f32 %v1276, %v1312
        %v1321 = vadd.f32 %v1277, %v1313
        %1322 = vset.pattern.permute.xlu0 2
        %1323 = vperm.xlu0 %1322, %v1238
        %v1324 = vpop.permute.xlu0 %1323
        %1325 = vset.pattern.permute.xlu0 2
        %1326 = vperm.xlu0 %1325, %v1239
        %v1327 = vpop.permute.xlu0 %1326
        %1328 = vset.pattern.permute.xlu0 2
        %1329 = vperm.xlu0 %1328, %v1240
        %v1330 = vpop.permute.xlu0 %1329
        %1331 = vset.pattern.permute.xlu0 2
        %1332 = vperm.xlu0 %1331, %v1241
        %v1333 = vpop.permute.xlu0 %1332
        %vm1334 = vcmp.eq.s32.totalorder %v414, %v1324
        %vm1335 = vcmp.eq.s32.totalorder %v415, %v1324
        %vm1336 = vcmp.eq.s32.totalorder %v414, %v1327
        %vm1337 = vcmp.eq.s32.totalorder %v415, %v1327
        %vm1338 = vcmp.eq.s32.totalorder %v414, %v1330
        %vm1339 = vcmp.eq.s32.totalorder %v415, %v1330
        %vm1340 = vcmp.eq.s32.totalorder %v414, %v1333
        %vm1341 = vcmp.eq.s32.totalorder %v415, %v1333
        %v1342 = vsel %vm1334, 1, 0
        %v1343 = vsel %vm1335, 1, 0
        %v1344 = vsel %vm1336, 1, 0
        %v1345 = vsel %vm1337, 1, 0
        %v1346 = vsel %vm1338, 1, 0
        %v1347 = vsel %vm1339, 1, 0
        %v1348 = vsel %vm1340, 1, 0
        %v1349 = vsel %vm1341, 1, 0
        %v1350 = vcvt.s32.f32 %v1342
        %v1351 = vcvt.s32.f32 %v1343
        %v1352 = vcvt.s32.f32 %v1344
        %v1353 = vcvt.s32.f32 %v1345
        %v1354 = vcvt.s32.f32 %v1346
        %v1355 = vcvt.s32.f32 %v1347
        %v1356 = vcvt.s32.f32 %v1348
        %v1357 = vcvt.s32.f32 %v1349
        %v1358 = vadd.f32 %v1314, %v1350
        %v1359 = vadd.f32 %v1315, %v1351
        %v1360 = vadd.f32 %v1316, %v1352
        %v1361 = vadd.f32 %v1317, %v1353
        %v1362 = vadd.f32 %v1318, %v1354
        %v1363 = vadd.f32 %v1319, %v1355
        %v1364 = vadd.f32 %v1320, %v1356
        %v1365 = vadd.f32 %v1321, %v1357
        %1366 = vset.pattern.permute.xlu0 3
        %1367 = vperm.xlu0 %1366, %v1238
        %v1368 = vpop.permute.xlu0 %1367
        %1369 = vset.pattern.permute.xlu0 3
        %1370 = vperm.xlu0 %1369, %v1239
        %v1371 = vpop.permute.xlu0 %1370
        %1372 = vset.pattern.permute.xlu0 3
        %1373 = vperm.xlu0 %1372, %v1240
        %v1374 = vpop.permute.xlu0 %1373
        %1375 = vset.pattern.permute.xlu0 3
        %1376 = vperm.xlu0 %1375, %v1241
        %v1377 = vpop.permute.xlu0 %1376
        %vm1378 = vcmp.eq.s32.totalorder %v414, %v1368
        %vm1379 = vcmp.eq.s32.totalorder %v415, %v1368
        %vm1380 = vcmp.eq.s32.totalorder %v414, %v1371
        %vm1381 = vcmp.eq.s32.totalorder %v415, %v1371
        %vm1382 = vcmp.eq.s32.totalorder %v414, %v1374
        %vm1383 = vcmp.eq.s32.totalorder %v415, %v1374
        %vm1384 = vcmp.eq.s32.totalorder %v414, %v1377
        %vm1385 = vcmp.eq.s32.totalorder %v415, %v1377
        %v1386 = vsel %vm1378, 1, 0
        %v1387 = vsel %vm1379, 1, 0
        %v1388 = vsel %vm1380, 1, 0
        %v1389 = vsel %vm1381, 1, 0
        %v1390 = vsel %vm1382, 1, 0
        %v1391 = vsel %vm1383, 1, 0
        %v1392 = vsel %vm1384, 1, 0
        %v1393 = vsel %vm1385, 1, 0
        %v1394 = vcvt.s32.f32 %v1386
        %v1395 = vcvt.s32.f32 %v1387
        %v1396 = vcvt.s32.f32 %v1388
        %v1397 = vcvt.s32.f32 %v1389
        %v1398 = vcvt.s32.f32 %v1390
        %v1399 = vcvt.s32.f32 %v1391
        %v1400 = vcvt.s32.f32 %v1392
        %v1401 = vcvt.s32.f32 %v1393
        %v1402 = vadd.f32 %v1358, %v1394
        %v1403 = vadd.f32 %v1359, %v1395
        %v1404 = vadd.f32 %v1360, %v1396
        %v1405 = vadd.f32 %v1361, %v1397
        %v1406 = vadd.f32 %v1362, %v1398
        %v1407 = vadd.f32 %v1363, %v1399
        %v1408 = vadd.f32 %v1364, %v1400
        %v1409 = vadd.f32 %v1365, %v1401
        %1410 = vset.pattern.permute.xlu0 4
        %1411 = vperm.xlu0 %1410, %v1238
        %v1412 = vpop.permute.xlu0 %1411
        %1413 = vset.pattern.permute.xlu0 4
        %1414 = vperm.xlu0 %1413, %v1239
        %v1415 = vpop.permute.xlu0 %1414
        %1416 = vset.pattern.permute.xlu0 4
        %1417 = vperm.xlu0 %1416, %v1240
        %v1418 = vpop.permute.xlu0 %1417
        %1419 = vset.pattern.permute.xlu0 4
        %1420 = vperm.xlu0 %1419, %v1241
        %v1421 = vpop.permute.xlu0 %1420
        %vm1422 = vcmp.eq.s32.totalorder %v414, %v1412
        %vm1423 = vcmp.eq.s32.totalorder %v415, %v1412
        %vm1424 = vcmp.eq.s32.totalorder %v414, %v1415
        %vm1425 = vcmp.eq.s32.totalorder %v415, %v1415
        %vm1426 = vcmp.eq.s32.totalorder %v414, %v1418
        %vm1427 = vcmp.eq.s32.totalorder %v415, %v1418
        %vm1428 = vcmp.eq.s32.totalorder %v414, %v1421
        %vm1429 = vcmp.eq.s32.totalorder %v415, %v1421
        %v1430 = vsel %vm1422, 1, 0
        %v1431 = vsel %vm1423, 1, 0
        %v1432 = vsel %vm1424, 1, 0
        %v1433 = vsel %vm1425, 1, 0
        %v1434 = vsel %vm1426, 1, 0
        %v1435 = vsel %vm1427, 1, 0
        %v1436 = vsel %vm1428, 1, 0
        %v1437 = vsel %vm1429, 1, 0
        %v1438 = vcvt.s32.f32 %v1430
        %v1439 = vcvt.s32.f32 %v1431
        %v1440 = vcvt.s32.f32 %v1432
        %v1441 = vcvt.s32.f32 %v1433
        %v1442 = vcvt.s32.f32 %v1434
        %v1443 = vcvt.s32.f32 %v1435
        %v1444 = vcvt.s32.f32 %v1436
        %v1445 = vcvt.s32.f32 %v1437
        %v1446 = vadd.f32 %v1402, %v1438
        %v1447 = vadd.f32 %v1403, %v1439
        %v1448 = vadd.f32 %v1404, %v1440
        %v1449 = vadd.f32 %v1405, %v1441
        %v1450 = vadd.f32 %v1406, %v1442
        %v1451 = vadd.f32 %v1407, %v1443
        %v1452 = vadd.f32 %v1408, %v1444
        %v1453 = vadd.f32 %v1409, %v1445
        %1454 = vset.pattern.permute.xlu0 5
        %1455 = vperm.xlu0 %1454, %v1238
        %v1456 = vpop.permute.xlu0 %1455
        %1457 = vset.pattern.permute.xlu0 5
        %1458 = vperm.xlu0 %1457, %v1239
        %v1459 = vpop.permute.xlu0 %1458
        %1460 = vset.pattern.permute.xlu0 5
        %1461 = vperm.xlu0 %1460, %v1240
        %v1462 = vpop.permute.xlu0 %1461
        %1463 = vset.pattern.permute.xlu0 5
        %1464 = vperm.xlu0 %1463, %v1241
        %v1465 = vpop.permute.xlu0 %1464
        %vm1466 = vcmp.eq.s32.totalorder %v414, %v1456
        %vm1467 = vcmp.eq.s32.totalorder %v415, %v1456
        %vm1468 = vcmp.eq.s32.totalorder %v414, %v1459
        %vm1469 = vcmp.eq.s32.totalorder %v415, %v1459
        %vm1470 = vcmp.eq.s32.totalorder %v414, %v1462
        %vm1471 = vcmp.eq.s32.totalorder %v415, %v1462
        %vm1472 = vcmp.eq.s32.totalorder %v414, %v1465
        %vm1473 = vcmp.eq.s32.totalorder %v415, %v1465
        %v1474 = vsel %vm1466, 1, 0
        %v1475 = vsel %vm1467, 1, 0
        %v1476 = vsel %vm1468, 1, 0
        %v1477 = vsel %vm1469, 1, 0
        %v1478 = vsel %vm1470, 1, 0
        %v1479 = vsel %vm1471, 1, 0
        %v1480 = vsel %vm1472, 1, 0
        %v1481 = vsel %vm1473, 1, 0
        %v1482 = vcvt.s32.f32 %v1474
        %v1483 = vcvt.s32.f32 %v1475
        %v1484 = vcvt.s32.f32 %v1476
        %v1485 = vcvt.s32.f32 %v1477
        %v1486 = vcvt.s32.f32 %v1478
        %v1487 = vcvt.s32.f32 %v1479
        %v1488 = vcvt.s32.f32 %v1480
        %v1489 = vcvt.s32.f32 %v1481
        %v1490 = vadd.f32 %v1446, %v1482
        %v1491 = vadd.f32 %v1447, %v1483
        %v1492 = vadd.f32 %v1448, %v1484
        %v1493 = vadd.f32 %v1449, %v1485
        %v1494 = vadd.f32 %v1450, %v1486
        %v1495 = vadd.f32 %v1451, %v1487
        %v1496 = vadd.f32 %v1452, %v1488
        %v1497 = vadd.f32 %v1453, %v1489
        %1498 = vset.pattern.permute.xlu0 6
        %1499 = vperm.xlu0 %1498, %v1238
        %v1500 = vpop.permute.xlu0 %1499
        %1501 = vset.pattern.permute.xlu0 6
        %1502 = vperm.xlu0 %1501, %v1239
        %v1503 = vpop.permute.xlu0 %1502
        %1504 = vset.pattern.permute.xlu0 6
        %1505 = vperm.xlu0 %1504, %v1240
        %v1506 = vpop.permute.xlu0 %1505
        %1507 = vset.pattern.permute.xlu0 6
        %1508 = vperm.xlu0 %1507, %v1241
        %v1509 = vpop.permute.xlu0 %1508
        %vm1510 = vcmp.eq.s32.totalorder %v414, %v1500
        %vm1511 = vcmp.eq.s32.totalorder %v415, %v1500
        %vm1512 = vcmp.eq.s32.totalorder %v414, %v1503
        %vm1513 = vcmp.eq.s32.totalorder %v415, %v1503
        %vm1514 = vcmp.eq.s32.totalorder %v414, %v1506
        %vm1515 = vcmp.eq.s32.totalorder %v415, %v1506
        %vm1516 = vcmp.eq.s32.totalorder %v414, %v1509
        %vm1517 = vcmp.eq.s32.totalorder %v415, %v1509
        %v1518 = vsel %vm1510, 1, 0
        %v1519 = vsel %vm1511, 1, 0
        %v1520 = vsel %vm1512, 1, 0
        %v1521 = vsel %vm1513, 1, 0
        %v1522 = vsel %vm1514, 1, 0
        %v1523 = vsel %vm1515, 1, 0
        %v1524 = vsel %vm1516, 1, 0
        %v1525 = vsel %vm1517, 1, 0
        %v1526 = vcvt.s32.f32 %v1518
        %v1527 = vcvt.s32.f32 %v1519
        %v1528 = vcvt.s32.f32 %v1520
        %v1529 = vcvt.s32.f32 %v1521
        %v1530 = vcvt.s32.f32 %v1522
        %v1531 = vcvt.s32.f32 %v1523
        %v1532 = vcvt.s32.f32 %v1524
        %v1533 = vcvt.s32.f32 %v1525
        %v1534 = vadd.f32 %v1490, %v1526
        %v1535 = vadd.f32 %v1491, %v1527
        %v1536 = vadd.f32 %v1492, %v1528
        %v1537 = vadd.f32 %v1493, %v1529
        %v1538 = vadd.f32 %v1494, %v1530
        %v1539 = vadd.f32 %v1495, %v1531
        %v1540 = vadd.f32 %v1496, %v1532
        %v1541 = vadd.f32 %v1497, %v1533
        %1542 = vset.pattern.permute.xlu0 7
        %1543 = vperm.xlu0 %1542, %v1238
        %v1544 = vpop.permute.xlu0 %1543
        %1545 = vset.pattern.permute.xlu0 7
        %1546 = vperm.xlu0 %1545, %v1239
        %v1547 = vpop.permute.xlu0 %1546
        %1548 = vset.pattern.permute.xlu0 7
        %1549 = vperm.xlu0 %1548, %v1240
        %v1550 = vpop.permute.xlu0 %1549
        %1551 = vset.pattern.permute.xlu0 7
        %1552 = vperm.xlu0 %1551, %v1241
        %v1553 = vpop.permute.xlu0 %1552
        %vm1554 = vcmp.eq.s32.totalorder %v414, %v1544
        %vm1555 = vcmp.eq.s32.totalorder %v415, %v1544
        %vm1556 = vcmp.eq.s32.totalorder %v414, %v1547
        %vm1557 = vcmp.eq.s32.totalorder %v415, %v1547
        %vm1558 = vcmp.eq.s32.totalorder %v414, %v1550
        %vm1559 = vcmp.eq.s32.totalorder %v415, %v1550
        %vm1560 = vcmp.eq.s32.totalorder %v414, %v1553
        %vm1561 = vcmp.eq.s32.totalorder %v415, %v1553
        %v1562 = vsel %vm1554, 1, 0
        %v1563 = vsel %vm1555, 1, 0
        %v1564 = vsel %vm1556, 1, 0
        %v1565 = vsel %vm1557, 1, 0
        %v1566 = vsel %vm1558, 1, 0
        %v1567 = vsel %vm1559, 1, 0
        %v1568 = vsel %vm1560, 1, 0
        %v1569 = vsel %vm1561, 1, 0
        %v1570 = vcvt.s32.f32 %v1562
        %v1571 = vcvt.s32.f32 %v1563
        %v1572 = vcvt.s32.f32 %v1564
        %v1573 = vcvt.s32.f32 %v1565
        %v1574 = vcvt.s32.f32 %v1566
        %v1575 = vcvt.s32.f32 %v1567
        %v1576 = vcvt.s32.f32 %v1568
        %v1577 = vcvt.s32.f32 %v1569
        %v1578 = vadd.f32 %v1534, %v1570
        %v1579 = vadd.f32 %v1535, %v1571
        %v1580 = vadd.f32 %v1536, %v1572
        %v1581 = vadd.f32 %v1537, %v1573
        %v1582 = vadd.f32 %v1538, %v1574
        %v1583 = vadd.f32 %v1539, %v1575
        %v1584 = vadd.f32 %v1540, %v1576
        %v1585 = vadd.f32 %v1541, %v1577
        %v1586 = vmul.f32 %v1219, %v1578
        %v1587 = vmul.f32 %v1220, %v1579
        %v1588 = vmul.f32 %v1221, %v1580
        %v1589 = vmul.f32 %v1222, %v1581
        %v1590 = vmul.f32 %v1223, %v1582
        %v1591 = vmul.f32 %v1224, %v1583
        %v1592 = vmul.f32 %v1225, %v1584
        %v1593 = vmul.f32 %v1226, %v1585
        %v1594 = vadd.f32 %v1586, %v1587
        %1595 = vadd.xlane.f32.xlu0 %v1594
        %v1596 = vpop.xlane.xlu0 %1595
        %v1597 = vadd.f32 %v1588, %v1589
        %1598 = vadd.xlane.f32.xlu0 %v1597
        %v1599 = vpop.xlane.xlu0 %1598
        %v1600 = vadd.f32 %v1590, %v1591
        %1601 = vadd.xlane.f32.xlu0 %v1600
        %v1602 = vpop.xlane.xlu0 %1601
        %v1603 = vadd.f32 %v1592, %v1593
        %1604 = vadd.xlane.f32.xlu0 %v1603
        %v1605 = vpop.xlane.xlu0 %1604
        %v1606 = vadd.f32 %v802, %v1596
        %v1607 = vadd.f32 %v803, %v1599
        %v1608 = vadd.f32 %v804, %v1602
        %v1609 = vadd.f32 %v805, %v1605
        %v1610 = vsub.s32 %v409, %v1237
        %v1611 = vsub.s32 %v410, %v1237
        %v1612 = vsub.s32 %v411, %v1237
        %v1613 = vsub.s32 %v412, %v1237
        %1614 = vset.pattern.permute.xlu0 0
        %1615 = vperm.xlu0 %1614, %v1610
        %v1616 = vpop.permute.xlu0 %1615
        %1617 = vset.pattern.permute.xlu0 0
        %1618 = vperm.xlu0 %1617, %v1611
        %v1619 = vpop.permute.xlu0 %1618
        %1620 = vset.pattern.permute.xlu0 0
        %1621 = vperm.xlu0 %1620, %v1612
        %v1622 = vpop.permute.xlu0 %1621
        %1623 = vset.pattern.permute.xlu0 0
        %1624 = vperm.xlu0 %1623, %v1613
        %v1625 = vpop.permute.xlu0 %1624
        %vm1626 = vcmp.eq.s32.totalorder %v414, %v1616
        %vm1627 = vcmp.eq.s32.totalorder %v415, %v1616
        %vm1628 = vcmp.eq.s32.totalorder %v414, %v1619
        %vm1629 = vcmp.eq.s32.totalorder %v415, %v1619
        %vm1630 = vcmp.eq.s32.totalorder %v414, %v1622
        %vm1631 = vcmp.eq.s32.totalorder %v415, %v1622
        %vm1632 = vcmp.eq.s32.totalorder %v414, %v1625
        %vm1633 = vcmp.eq.s32.totalorder %v415, %v1625
        %v1634 = vsel %vm1626, %v1228, 0.0
        %v1635 = vsel %vm1627, %v1229, 0.0
        %v1636 = vsel %vm1628, %v1230, 0.0
        %v1637 = vsel %vm1629, %v1231, 0.0
        %v1638 = vsel %vm1630, %v1232, 0.0
        %v1639 = vsel %vm1631, %v1233, 0.0
        %v1640 = vsel %vm1632, %v1234, 0.0
        %v1641 = vsel %vm1633, %v1235, 0.0
        %v1642 = vadd.f32 %v1634, %v1635
        %1643 = vadd.xlane.f32.xlu0 %v1642
        %v1644 = vpop.xlane.xlu0 %1643
        %v1645 = vadd.f32 %v1636, %v1637
        %1646 = vadd.xlane.f32.xlu0 %v1645
        %v1647 = vpop.xlane.xlu0 %1646
        %v1648 = vadd.f32 %v1638, %v1639
        %1649 = vadd.xlane.f32.xlu0 %v1648
        %v1650 = vpop.xlane.xlu0 %1649
        %v1651 = vadd.f32 %v1640, %v1641
        %1652 = vadd.xlane.f32.xlu0 %v1651
        %v1653 = vpop.xlane.xlu0 %1652
        %v1654 = vsel %vm852, %v1644, 0.0
        %v1655 = vsel %vm852, %v1647, 0.0
        %v1656 = vsel %vm852, %v1650, 0.0
        %v1657 = vsel %vm852, %v1653, 0.0
        %v1658 = vadd.f32 %v1214, %v1654
        %v1659 = vadd.f32 %v1215, %v1655
        %v1660 = vadd.f32 %v1216, %v1656
        %v1661 = vadd.f32 %v1217, %v1657
        %1662 = vset.pattern.permute.xlu0 1
        %1663 = vperm.xlu0 %1662, %v1610
        %v1664 = vpop.permute.xlu0 %1663
        %1665 = vset.pattern.permute.xlu0 1
        %1666 = vperm.xlu0 %1665, %v1611
        %v1667 = vpop.permute.xlu0 %1666
        %1668 = vset.pattern.permute.xlu0 1
        %1669 = vperm.xlu0 %1668, %v1612
        %v1670 = vpop.permute.xlu0 %1669
        %1671 = vset.pattern.permute.xlu0 1
        %1672 = vperm.xlu0 %1671, %v1613
        %v1673 = vpop.permute.xlu0 %1672
        %vm1674 = vcmp.eq.s32.totalorder %v414, %v1664
        %vm1675 = vcmp.eq.s32.totalorder %v415, %v1664
        %vm1676 = vcmp.eq.s32.totalorder %v414, %v1667
        %vm1677 = vcmp.eq.s32.totalorder %v415, %v1667
        %vm1678 = vcmp.eq.s32.totalorder %v414, %v1670
        %vm1679 = vcmp.eq.s32.totalorder %v415, %v1670
        %vm1680 = vcmp.eq.s32.totalorder %v414, %v1673
        %vm1681 = vcmp.eq.s32.totalorder %v415, %v1673
        %v1682 = vsel %vm1674, %v1228, 0.0
        %v1683 = vsel %vm1675, %v1229, 0.0
        %v1684 = vsel %vm1676, %v1230, 0.0
        %v1685 = vsel %vm1677, %v1231, 0.0
        %v1686 = vsel %vm1678, %v1232, 0.0
        %v1687 = vsel %vm1679, %v1233, 0.0
        %v1688 = vsel %vm1680, %v1234, 0.0
        %v1689 = vsel %vm1681, %v1235, 0.0
        %v1690 = vadd.f32 %v1682, %v1683
        %1691 = vadd.xlane.f32.xlu0 %v1690
        %v1692 = vpop.xlane.xlu0 %1691
        %v1693 = vadd.f32 %v1684, %v1685
        %1694 = vadd.xlane.f32.xlu0 %v1693
        %v1695 = vpop.xlane.xlu0 %1694
        %v1696 = vadd.f32 %v1686, %v1687
        %1697 = vadd.xlane.f32.xlu0 %v1696
        %v1698 = vpop.xlane.xlu0 %1697
        %v1699 = vadd.f32 %v1688, %v1689
        %1700 = vadd.xlane.f32.xlu0 %v1699
        %v1701 = vpop.xlane.xlu0 %1700
        %v1702 = vsel %vm903, %v1692, 0.0
        %v1703 = vsel %vm903, %v1695, 0.0
        %v1704 = vsel %vm903, %v1698, 0.0
        %v1705 = vsel %vm903, %v1701, 0.0
        %v1706 = vadd.f32 %v1658, %v1702
        %v1707 = vadd.f32 %v1659, %v1703
        %v1708 = vadd.f32 %v1660, %v1704
        %v1709 = vadd.f32 %v1661, %v1705
        %1710 = vset.pattern.permute.xlu0 2
        %1711 = vperm.xlu0 %1710, %v1610
        %v1712 = vpop.permute.xlu0 %1711
        %1713 = vset.pattern.permute.xlu0 2
        %1714 = vperm.xlu0 %1713, %v1611
        %v1715 = vpop.permute.xlu0 %1714
        %1716 = vset.pattern.permute.xlu0 2
        %1717 = vperm.xlu0 %1716, %v1612
        %v1718 = vpop.permute.xlu0 %1717
        %1719 = vset.pattern.permute.xlu0 2
        %1720 = vperm.xlu0 %1719, %v1613
        %v1721 = vpop.permute.xlu0 %1720
        %vm1722 = vcmp.eq.s32.totalorder %v414, %v1712
        %vm1723 = vcmp.eq.s32.totalorder %v415, %v1712
        %vm1724 = vcmp.eq.s32.totalorder %v414, %v1715
        %vm1725 = vcmp.eq.s32.totalorder %v415, %v1715
        %vm1726 = vcmp.eq.s32.totalorder %v414, %v1718
        %vm1727 = vcmp.eq.s32.totalorder %v415, %v1718
        %vm1728 = vcmp.eq.s32.totalorder %v414, %v1721
        %vm1729 = vcmp.eq.s32.totalorder %v415, %v1721
        %v1730 = vsel %vm1722, %v1228, 0.0
        %v1731 = vsel %vm1723, %v1229, 0.0
        %v1732 = vsel %vm1724, %v1230, 0.0
        %v1733 = vsel %vm1725, %v1231, 0.0
        %v1734 = vsel %vm1726, %v1232, 0.0
        %v1735 = vsel %vm1727, %v1233, 0.0
        %v1736 = vsel %vm1728, %v1234, 0.0
        %v1737 = vsel %vm1729, %v1235, 0.0
        %v1738 = vadd.f32 %v1730, %v1731
        %1739 = vadd.xlane.f32.xlu0 %v1738
        %v1740 = vpop.xlane.xlu0 %1739
        %v1741 = vadd.f32 %v1732, %v1733
        %1742 = vadd.xlane.f32.xlu0 %v1741
        %v1743 = vpop.xlane.xlu0 %1742
        %v1744 = vadd.f32 %v1734, %v1735
        %1745 = vadd.xlane.f32.xlu0 %v1744
        %v1746 = vpop.xlane.xlu0 %1745
        %v1747 = vadd.f32 %v1736, %v1737
        %1748 = vadd.xlane.f32.xlu0 %v1747
        %v1749 = vpop.xlane.xlu0 %1748
        %v1750 = vsel %vm954, %v1740, 0.0
        %v1751 = vsel %vm954, %v1743, 0.0
        %v1752 = vsel %vm954, %v1746, 0.0
        %v1753 = vsel %vm954, %v1749, 0.0
        %v1754 = vadd.f32 %v1706, %v1750
        %v1755 = vadd.f32 %v1707, %v1751
        %v1756 = vadd.f32 %v1708, %v1752
        %v1757 = vadd.f32 %v1709, %v1753
        %1758 = vset.pattern.permute.xlu0 3
        %1759 = vperm.xlu0 %1758, %v1610
        %v1760 = vpop.permute.xlu0 %1759
        %1761 = vset.pattern.permute.xlu0 3
        %1762 = vperm.xlu0 %1761, %v1611
        %v1763 = vpop.permute.xlu0 %1762
        %1764 = vset.pattern.permute.xlu0 3
        %1765 = vperm.xlu0 %1764, %v1612
        %v1766 = vpop.permute.xlu0 %1765
        %1767 = vset.pattern.permute.xlu0 3
        %1768 = vperm.xlu0 %1767, %v1613
        %v1769 = vpop.permute.xlu0 %1768
        %vm1770 = vcmp.eq.s32.totalorder %v414, %v1760
        %vm1771 = vcmp.eq.s32.totalorder %v415, %v1760
        %vm1772 = vcmp.eq.s32.totalorder %v414, %v1763
        %vm1773 = vcmp.eq.s32.totalorder %v415, %v1763
        %vm1774 = vcmp.eq.s32.totalorder %v414, %v1766
        %vm1775 = vcmp.eq.s32.totalorder %v415, %v1766
        %vm1776 = vcmp.eq.s32.totalorder %v414, %v1769
        %vm1777 = vcmp.eq.s32.totalorder %v415, %v1769
        %v1778 = vsel %vm1770, %v1228, 0.0
        %v1779 = vsel %vm1771, %v1229, 0.0
        %v1780 = vsel %vm1772, %v1230, 0.0
        %v1781 = vsel %vm1773, %v1231, 0.0
        %v1782 = vsel %vm1774, %v1232, 0.0
        %v1783 = vsel %vm1775, %v1233, 0.0
        %v1784 = vsel %vm1776, %v1234, 0.0
        %v1785 = vsel %vm1777, %v1235, 0.0
        %v1786 = vadd.f32 %v1778, %v1779
        %1787 = vadd.xlane.f32.xlu0 %v1786
        %v1788 = vpop.xlane.xlu0 %1787
        %v1789 = vadd.f32 %v1780, %v1781
        %1790 = vadd.xlane.f32.xlu0 %v1789
        %v1791 = vpop.xlane.xlu0 %1790
        %v1792 = vadd.f32 %v1782, %v1783
        %1793 = vadd.xlane.f32.xlu0 %v1792
        %v1794 = vpop.xlane.xlu0 %1793
        %v1795 = vadd.f32 %v1784, %v1785
        %1796 = vadd.xlane.f32.xlu0 %v1795
        %v1797 = vpop.xlane.xlu0 %1796
        %v1798 = vsel %vm1005, %v1788, 0.0
        %v1799 = vsel %vm1005, %v1791, 0.0
        %v1800 = vsel %vm1005, %v1794, 0.0
        %v1801 = vsel %vm1005, %v1797, 0.0
        %v1802 = vadd.f32 %v1754, %v1798
        %v1803 = vadd.f32 %v1755, %v1799
        %v1804 = vadd.f32 %v1756, %v1800
        %v1805 = vadd.f32 %v1757, %v1801
        %1806 = vset.pattern.permute.xlu0 4
        %1807 = vperm.xlu0 %1806, %v1610
        %v1808 = vpop.permute.xlu0 %1807
        %1809 = vset.pattern.permute.xlu0 4
        %1810 = vperm.xlu0 %1809, %v1611
        %v1811 = vpop.permute.xlu0 %1810
        %1812 = vset.pattern.permute.xlu0 4
        %1813 = vperm.xlu0 %1812, %v1612
        %v1814 = vpop.permute.xlu0 %1813
        %1815 = vset.pattern.permute.xlu0 4
        %1816 = vperm.xlu0 %1815, %v1613
        %v1817 = vpop.permute.xlu0 %1816
        %vm1818 = vcmp.eq.s32.totalorder %v414, %v1808
        %vm1819 = vcmp.eq.s32.totalorder %v415, %v1808
        %vm1820 = vcmp.eq.s32.totalorder %v414, %v1811
        %vm1821 = vcmp.eq.s32.totalorder %v415, %v1811
        %vm1822 = vcmp.eq.s32.totalorder %v414, %v1814
        %vm1823 = vcmp.eq.s32.totalorder %v415, %v1814
        %vm1824 = vcmp.eq.s32.totalorder %v414, %v1817
        %vm1825 = vcmp.eq.s32.totalorder %v415, %v1817
        %v1826 = vsel %vm1818, %v1228, 0.0
        %v1827 = vsel %vm1819, %v1229, 0.0
        %v1828 = vsel %vm1820, %v1230, 0.0
        %v1829 = vsel %vm1821, %v1231, 0.0
        %v1830 = vsel %vm1822, %v1232, 0.0
        %v1831 = vsel %vm1823, %v1233, 0.0
        %v1832 = vsel %vm1824, %v1234, 0.0
        %v1833 = vsel %vm1825, %v1235, 0.0
        %v1834 = vadd.f32 %v1826, %v1827
        %1835 = vadd.xlane.f32.xlu0 %v1834
        %v1836 = vpop.xlane.xlu0 %1835
        %v1837 = vadd.f32 %v1828, %v1829
        %1838 = vadd.xlane.f32.xlu0 %v1837
        %v1839 = vpop.xlane.xlu0 %1838
        %v1840 = vadd.f32 %v1830, %v1831
        %1841 = vadd.xlane.f32.xlu0 %v1840
        %v1842 = vpop.xlane.xlu0 %1841
        %v1843 = vadd.f32 %v1832, %v1833
        %1844 = vadd.xlane.f32.xlu0 %v1843
        %v1845 = vpop.xlane.xlu0 %1844
        %v1846 = vsel %vm1056, %v1836, 0.0
        %v1847 = vsel %vm1056, %v1839, 0.0
        %v1848 = vsel %vm1056, %v1842, 0.0
        %v1849 = vsel %vm1056, %v1845, 0.0
        %v1850 = vadd.f32 %v1802, %v1846
        %v1851 = vadd.f32 %v1803, %v1847
        %v1852 = vadd.f32 %v1804, %v1848
        %v1853 = vadd.f32 %v1805, %v1849
        %1854 = vset.pattern.permute.xlu0 5
        %1855 = vperm.xlu0 %1854, %v1610
        %v1856 = vpop.permute.xlu0 %1855
        %1857 = vset.pattern.permute.xlu0 5
        %1858 = vperm.xlu0 %1857, %v1611
        %v1859 = vpop.permute.xlu0 %1858
        %1860 = vset.pattern.permute.xlu0 5
        %1861 = vperm.xlu0 %1860, %v1612
        %v1862 = vpop.permute.xlu0 %1861
        %1863 = vset.pattern.permute.xlu0 5
        %1864 = vperm.xlu0 %1863, %v1613
        %v1865 = vpop.permute.xlu0 %1864
        %vm1866 = vcmp.eq.s32.totalorder %v414, %v1856
        %vm1867 = vcmp.eq.s32.totalorder %v415, %v1856
        %vm1868 = vcmp.eq.s32.totalorder %v414, %v1859
        %vm1869 = vcmp.eq.s32.totalorder %v415, %v1859
        %vm1870 = vcmp.eq.s32.totalorder %v414, %v1862
        %vm1871 = vcmp.eq.s32.totalorder %v415, %v1862
        %vm1872 = vcmp.eq.s32.totalorder %v414, %v1865
        %vm1873 = vcmp.eq.s32.totalorder %v415, %v1865
        %v1874 = vsel %vm1866, %v1228, 0.0
        %v1875 = vsel %vm1867, %v1229, 0.0
        %v1876 = vsel %vm1868, %v1230, 0.0
        %v1877 = vsel %vm1869, %v1231, 0.0
        %v1878 = vsel %vm1870, %v1232, 0.0
        %v1879 = vsel %vm1871, %v1233, 0.0
        %v1880 = vsel %vm1872, %v1234, 0.0
        %v1881 = vsel %vm1873, %v1235, 0.0
        %v1882 = vadd.f32 %v1874, %v1875
        %1883 = vadd.xlane.f32.xlu0 %v1882
        %v1884 = vpop.xlane.xlu0 %1883
        %v1885 = vadd.f32 %v1876, %v1877
        %1886 = vadd.xlane.f32.xlu0 %v1885
        %v1887 = vpop.xlane.xlu0 %1886
        %v1888 = vadd.f32 %v1878, %v1879
        %1889 = vadd.xlane.f32.xlu0 %v1888
        %v1890 = vpop.xlane.xlu0 %1889
        %v1891 = vadd.f32 %v1880, %v1881
        %1892 = vadd.xlane.f32.xlu0 %v1891
        %v1893 = vpop.xlane.xlu0 %1892
        %v1894 = vsel %vm1107, %v1884, 0.0
        %v1895 = vsel %vm1107, %v1887, 0.0
        %v1896 = vsel %vm1107, %v1890, 0.0
        %v1897 = vsel %vm1107, %v1893, 0.0
        %v1898 = vadd.f32 %v1850, %v1894
        %v1899 = vadd.f32 %v1851, %v1895
        %v1900 = vadd.f32 %v1852, %v1896
        %v1901 = vadd.f32 %v1853, %v1897
        %1902 = vset.pattern.permute.xlu0 6
        %1903 = vperm.xlu0 %1902, %v1610
        %v1904 = vpop.permute.xlu0 %1903
        %1905 = vset.pattern.permute.xlu0 6
        %1906 = vperm.xlu0 %1905, %v1611
        %v1907 = vpop.permute.xlu0 %1906
        %1908 = vset.pattern.permute.xlu0 6
        %1909 = vperm.xlu0 %1908, %v1612
        %v1910 = vpop.permute.xlu0 %1909
        %1911 = vset.pattern.permute.xlu0 6
        %1912 = vperm.xlu0 %1911, %v1613
        %v1913 = vpop.permute.xlu0 %1912
        %vm1914 = vcmp.eq.s32.totalorder %v414, %v1904
        %vm1915 = vcmp.eq.s32.totalorder %v415, %v1904
        %vm1916 = vcmp.eq.s32.totalorder %v414, %v1907
        %vm1917 = vcmp.eq.s32.totalorder %v415, %v1907
        %vm1918 = vcmp.eq.s32.totalorder %v414, %v1910
        %vm1919 = vcmp.eq.s32.totalorder %v415, %v1910
        %vm1920 = vcmp.eq.s32.totalorder %v414, %v1913
        %vm1921 = vcmp.eq.s32.totalorder %v415, %v1913
        %v1922 = vsel %vm1914, %v1228, 0.0
        %v1923 = vsel %vm1915, %v1229, 0.0
        %v1924 = vsel %vm1916, %v1230, 0.0
        %v1925 = vsel %vm1917, %v1231, 0.0
        %v1926 = vsel %vm1918, %v1232, 0.0
        %v1927 = vsel %vm1919, %v1233, 0.0
        %v1928 = vsel %vm1920, %v1234, 0.0
        %v1929 = vsel %vm1921, %v1235, 0.0
        %v1930 = vadd.f32 %v1922, %v1923
        %1931 = vadd.xlane.f32.xlu0 %v1930
        %v1932 = vpop.xlane.xlu0 %1931
        %v1933 = vadd.f32 %v1924, %v1925
        %1934 = vadd.xlane.f32.xlu0 %v1933
        %v1935 = vpop.xlane.xlu0 %1934
        %v1936 = vadd.f32 %v1926, %v1927
        %1937 = vadd.xlane.f32.xlu0 %v1936
        %v1938 = vpop.xlane.xlu0 %1937
        %v1939 = vadd.f32 %v1928, %v1929
        %1940 = vadd.xlane.f32.xlu0 %v1939
        %v1941 = vpop.xlane.xlu0 %1940
        %v1942 = vsel %vm1158, %v1932, 0.0
        %v1943 = vsel %vm1158, %v1935, 0.0
        %v1944 = vsel %vm1158, %v1938, 0.0
        %v1945 = vsel %vm1158, %v1941, 0.0
        %v1946 = vadd.f32 %v1898, %v1942
        %v1947 = vadd.f32 %v1899, %v1943
        %v1948 = vadd.f32 %v1900, %v1944
        %v1949 = vadd.f32 %v1901, %v1945
        %1950 = vset.pattern.permute.xlu0 7
        %1951 = vperm.xlu0 %1950, %v1610
        %v1952 = vpop.permute.xlu0 %1951
        %1953 = vset.pattern.permute.xlu0 7
        %1954 = vperm.xlu0 %1953, %v1611
        %v1955 = vpop.permute.xlu0 %1954
        %1956 = vset.pattern.permute.xlu0 7
        %1957 = vperm.xlu0 %1956, %v1612
        %v1958 = vpop.permute.xlu0 %1957
        %1959 = vset.pattern.permute.xlu0 7
        %1960 = vperm.xlu0 %1959, %v1613
        %v1961 = vpop.permute.xlu0 %1960
        %vm1962 = vcmp.eq.s32.totalorder %v414, %v1952
        %vm1963 = vcmp.eq.s32.totalorder %v415, %v1952
        %vm1964 = vcmp.eq.s32.totalorder %v414, %v1955
        %vm1965 = vcmp.eq.s32.totalorder %v415, %v1955
        %vm1966 = vcmp.eq.s32.totalorder %v414, %v1958
        %vm1967 = vcmp.eq.s32.totalorder %v415, %v1958
        %vm1968 = vcmp.eq.s32.totalorder %v414, %v1961
        %vm1969 = vcmp.eq.s32.totalorder %v415, %v1961
        %v1970 = vsel %vm1962, %v1228, 0.0
        %v1971 = vsel %vm1963, %v1229, 0.0
        %v1972 = vsel %vm1964, %v1230, 0.0
        %v1973 = vsel %vm1965, %v1231, 0.0
        %v1974 = vsel %vm1966, %v1232, 0.0
        %v1975 = vsel %vm1967, %v1233, 0.0
        %v1976 = vsel %vm1968, %v1234, 0.0
        %v1977 = vsel %vm1969, %v1235, 0.0
        %v1978 = vadd.f32 %v1970, %v1971
        %1979 = vadd.xlane.f32.xlu0 %v1978
        %v1980 = vpop.xlane.xlu0 %1979
        %v1981 = vadd.f32 %v1972, %v1973
        %1982 = vadd.xlane.f32.xlu0 %v1981
        %v1983 = vpop.xlane.xlu0 %1982
        %v1984 = vadd.f32 %v1974, %v1975
        %1985 = vadd.xlane.f32.xlu0 %v1984
        %v1986 = vpop.xlane.xlu0 %1985
        %v1987 = vadd.f32 %v1976, %v1977
        %1988 = vadd.xlane.f32.xlu0 %v1987
        %v1989 = vpop.xlane.xlu0 %1988
        %v1990 = vsel %vm1209, %v1980, 0.0
        %v1991 = vsel %vm1209, %v1983, 0.0
        %v1992 = vsel %vm1209, %v1986, 0.0
        %v1993 = vsel %vm1209, %v1989, 0.0
        %v1994 = vadd.f32 %v1946, %v1990
        %v1995 = vadd.f32 %v1947, %v1991
        %v1996 = vadd.f32 %v1948, %v1992
        %v1997 = vadd.f32 %v1949, %v1993
        %v1998 = vld [vmem:[%s382] sm:$0xff]
        %v1999 = vld [vmem:[%s382 + $0x8] sm:$0xff]
        %v2000 = vld [vmem:[%s382 + $0x10] sm:$0xff]
        %v2001 = vld [vmem:[%s382 + $0x18] sm:$0xff]
        %v2002 = vadd.f32 %v1998, %v1606
        %v2003 = vadd.f32 %v1999, %v1607
        %v2004 = vadd.f32 %v2000, %v1608
        %v2005 = vadd.f32 %v2001, %v1609
        %vm2006 = vcmask 7168
        %2007 = vst.msk [vmem:[%s382] sm:$0xff] %vm2006, %v2002
        %2008 = vst.msk [vmem:[%s382 + $0x8] sm:$0xff] %vm2006, %v2003
        %2009 = vst.msk [vmem:[%s382 + $0x10] sm:$0xff] %vm2006, %v2004
        %2010 = vst.msk [vmem:[%s382 + $0x18] sm:$0xff] %vm2006, %v2005
        %v2011 = vld [vmem:[%s387] sm:$0xff]
        %v2012 = vld [vmem:[%s387 + $0x8] sm:$0xff]
        %v2013 = vld [vmem:[%s387 + $0x10] sm:$0xff]
        %v2014 = vld [vmem:[%s387 + $0x18] sm:$0xff]
        %v2015 = vadd.f32 %v2011, %v1994
        %v2016 = vadd.f32 %v2012, %v1995
        %v2017 = vadd.f32 %v2013, %v1996
        %v2018 = vadd.f32 %v2014, %v1997
        %vm2019 = vcmask 64512
        %2020 = vst.msk [vmem:[%s387] sm:$0xff] %vm2019, %v2015
        %2021 = vst.msk [vmem:[%s387 + $0x8] sm:$0xff] %vm2019, %v2016
        %2022 = vst.msk [vmem:[%s387 + $0x10] sm:$0xff] %vm2019, %v2017
        %2023 = vst.msk [vmem:[%s387 + $0x18] sm:$0xff] %vm2019, %v2018
        %p2024 = scmp.lt.s32.totalorder %s21, 1
        %s2025 = scalar_select %p2024, %s21, 1
        %s2026 = smul.addr %s2025, 4
        %s2027 = smul.addr %s2026, 8
        %s2028 = scalar_lea.vmem %s4, %s2027
        %p2029 = scmp.lt.s32.totalorder %s21, 1
        %s2030 = scalar_select %p2029, %s21, 1
        %s2031 = smul.addr %s2030, 4
        %s2032 = smul.addr %s2031, 8
        %s2033 = scalar_lea.vmem %s5, %s2032
        // Predicated region
        $region87: #{kmer2vec_forward.1} parent=73 // pred_check
          %p2034 = pneg %p149
        $region88: #{kmer2vec_forward.1} parent=73 // pred_check_branch
          %2036 = sbr.rel (%p2034) target = $region90
        $region89: #{kmer2vec_forward.1} parent=73 // pred_region
          _
        $region90: #{kmer2vec_forward.1} parent=73 // pred_fallthru
          _
        // Predicated region
        $region91: #{kmer2vec_forward.1} parent=73 // pred_check
          %p2037 = pneg %p175
        $region92: #{kmer2vec_forward.1} parent=73 // pred_check_branch
          %2039 = sbr.rel (%p2037) target = $region94
        $region93: #{kmer2vec_forward.1} parent=73 // pred_region
          _
        $region94: #{kmer2vec_forward.1} parent=73 // pred_fallthru
          _
      $region74: #{kmer2vec_forward.1} parent=5 // pred_fallthru
        _
      %p2040 = scmp.le.s32.totalorder 2, %s12
      // Predicated region
      $region95: #{kmer2vec_forward.1} parent=5 // pred_check
        %p2041 = pneg %p2040
      $region96: #{kmer2vec_forward.1} parent=5 // pred_check_branch
        %2043 = sbr.rel (%p2041) target = $region98
      $region97: #{kmer2vec_forward.1} parent=5 // pred_region
        %s2044 = ssub.s32 %s12, 2
        // Predicated region
        $region99: #{kmer2vec_forward.1} parent=97 // pred_check
          %p2045 = pneg %p155
        $region100: #{kmer2vec_forward.1} parent=97 // pred_check_branch
          %2047 = sbr.rel (%p2045) target = $region102
        $region101: #{kmer2vec_forward.1} parent=97 // pred_region
          %p2048 = scmp.lt.s32.totalorder %s23, 1
          %s2049 = scalar_select %p2048, %s23, 1
          %s2050 = smul.addr %s2049, 4
          %s2051 = smul.addr %s2050, 8
          %s2052 = scalar_lea.vmem %s4, %s2051
        $region102: #{kmer2vec_forward.1} parent=97 // pred_fallthru
          _
        // Predicated region
        $region103: #{kmer2vec_forward.1} parent=97 // pred_check
          %p2053 = pneg %p181
        $region104: #{kmer2vec_forward.1} parent=97 // pred_check_branch
          %2055 = sbr.rel (%p2053) target = $region106
        $region105: #{kmer2vec_forward.1} parent=97 // pred_region
          %p2056 = scmp.lt.s32.totalorder %s23, 1
          %s2057 = scalar_select %p2056, %s23, 1
          %s2058 = smul.addr %s2057, 4
          %s2059 = smul.addr %s2058, 8
          %s2060 = scalar_lea.vmem %s5, %s2059
        $region106: #{kmer2vec_forward.1} parent=97 // pred_fallthru
          _
      $region98: #{kmer2vec_forward.1} parent=5 // pred_fallthru
        _
    $region6: #{kmer2vec_forward.1} parent=1 // loop_footer
      %s16 = sadd.s32 1, %s12
    $region7: #{kmer2vec_forward.1} parent=1 // loop_footer_branch
      %11 = sbr.rel target = $region3
    $region8: #{kmer2vec_forward.1} parent=1 // loop_exit
      _

</llo_original>
